<compile_context>
chip_gen: v6e
topology: v6e:2x2x1
jax: 0.10.0
libtpu: 0.0.40
codegen_flags: <defaults>
</compile_context>

<pallas_src>
import functools

import jax
import jax.numpy as jnp
from jax.experimental import pallas as pl
from jax.experimental.pallas import tpu as pltpu


def _round_up(x, m):
    return ((x + m - 1) // m) * m


# --------------------------------------------------------------------------- #
# Kernel: one batch tile of TM rows, single judge per tile, all judges'
# weights resident in VMEM.
# --------------------------------------------------------------------------- #
def _pcn_kernel(tile_judge_ref, tile_rows_ref, x_ref,
                w1_ref, b1_ref, w2_ref, b2_ref, v_ref, bv_ref, o_ref):
    t = pl.program_id(0)
    tj = tile_judge_ref[t]          # judge owning this batch tile
    nv = tile_rows_ref[t]           # number of valid rows in this tile

    # Fully-padded trailing tile: skip all MXU/EUP work, emit zeros (rows are
    # never gathered back, zeroing just keeps the HBM slab deterministic).
    @pl.when(nv == 0)
    def _():
        o_ref[...] = jnp.zeros_like(o_ref)

    @pl.when(nv > 0)
    def _():
        cdt = w1_ref.dtype                                    # f32 or bf16 operands
        x = x_ref[...].astype(cdt)                            # (TM, INp)

        # layer 1: z1 = sigmoid(x @ W1c + b1)   (f32 accumulation)
        z1 = jax.nn.sigmoid(
            jnp.dot(x, w1_ref[tj], preferred_element_type=jnp.float32)
            + b1_ref[tj])                                     # (TM, LP1)

        # layer 2: z2 = sigmoid(z1 @ W2c + b2)  (padded K-rows of W2c are zero)
        z2 = jax.nn.sigmoid(
            jnp.dot(z1.astype(cdt), w2_ref[tj],
                    preferred_element_type=jnp.float32)
            + b2_ref[tj])                                     # (TM, LP2)

        # head: logits = z2 @ Vc + bv           (lane-dense 128-wide store)
        o_ref[...] = (jnp.dot(z2.astype(cdt), v_ref[tj],
                              preferred_element_type=jnp.float32)
                      + bv_ref[tj]).astype(o_ref.dtype)       # (TM, QAp)


# --------------------------------------------------------------------------- #
# One-time parameter folding (per weight update, not per call).
# --------------------------------------------------------------------------- #
def fold_params(W1, W1a, W2, W2a, V, Va, compute_dtype=jnp.float32):
    J, INp1, L1 = W1a.shape
    IN = INp1 - 1
    L2 = W2.shape[1]
    Q, _, A = V.shape
    QA = Q * A

    INp = _round_up(IN, 8)      # sublane-aligned matmul K for layer 1
    LP1 = _round_up(L1, 8)      # hidden dims only rounded to sublane multiple
    LP2 = _round_up(L2, 8)
    QAp = _round_up(QA, 128)    # lane-dense output slab (unmasked vst)

    f32 = jnp.float32
    # Combined per-judge weights (J is small; fold once in XLA).
    W1c = (W1[None] + W1a).astype(f32)                              # (J, IN+1, L1)
    W2c = (W2[None] + W2a).astype(f32)                              # (J, L1+1, L2)
    V2d = jnp.transpose(V, (1, 0, 2)).reshape(L2 + 1, QA)           # (L2+1, Q*A)
    Va2d = jnp.transpose(Va, (0, 2, 1, 3)).reshape(J, L2 + 1, QA)   # (J, L2+1, Q*A)
    Vc = (V2d[None] + Va2d).astype(f32)                             # (J, L2+1, Q*A)

    # Split the bias row out; zero-pad.  Padded K-rows are zero so the
    # sigmoid(0)=0.5 padded hidden lanes never contribute; padded output lanes
    # are exactly zero and sliced away in the wrapper.
    W1m = jnp.pad(W1c[:, :IN, :],
                  ((0, 0), (0, INp - IN), (0, LP1 - L1))).astype(compute_dtype)
    b1 = jnp.pad(W1c[:, IN:, :], ((0, 0), (0, 0), (0, LP1 - L1)))
    W2m = jnp.pad(W2c[:, :L1, :],
                  ((0, 0), (0, LP1 - L1), (0, LP2 - L2))).astype(compute_dtype)
    b2 = jnp.pad(W2c[:, L1:, :], ((0, 0), (0, 0), (0, LP2 - L2)))
    Vm = jnp.pad(Vc[:, :L2, :],
                 ((0, 0), (0, LP2 - L2), (0, QAp - QA))).astype(compute_dtype)
    bv = jnp.pad(Vc[:, L2:, :], ((0, 0), (0, 0), (0, QAp - QA)))
    return (W1m, b1, W2m, b2, Vm, bv)


# --------------------------------------------------------------------------- #
# Forward pass.
# --------------------------------------------------------------------------- #
@functools.partial(jax.jit, static_argnames=("q", "a", "tm"))
def pcn_forward(params, X_machine_evals, X_human_judges, *, q, a, tm=512):
    """Returns logits of shape (B, output_size, num_answers)."""
    W1m, b1, W2m, b2, Vm, bv = params
    J, INp, LP1 = W1m.shape
    LP2 = W2m.shape[2]
    QAp = Vm.shape[2]
    B, IN = X_machine_evals.shape
    qa = q * a
    cdt = W1m.dtype

    x = jnp.pad(X_machine_evals.astype(jnp.float32),
                ((0, 0), (0, INp - IN))).astype(cdt)
    # NOTE: out-of-range judge ids are clamped (PyTorch would raise instead).
    judges = jnp.clip(X_human_judges[:, 0].astype(jnp.int32), 0, J - 1)

    # --- MoE-style grouping: sort rows by judge, pad each group to a tile ---
    nt = (B + tm - 1) // tm + J          # static upper bound on #tiles
    bp = nt * tm

    order = jnp.argsort(judges)                                   # (B,)
    js = judges[order]

    counts = jnp.bincount(judges, length=J).astype(jnp.int32)     # rows / judge
    tiles_per_j = (counts + tm - 1) // tm
    cum_tiles = jnp.cumsum(tiles_per_j)                           # inclusive
    first_tile = cum_tiles - tiles_per_j                          # tile start / judge
    tile_base = first_tile * tm                                   # padded row start
    grp_base = jnp.cumsum(counts) - counts                        # sorted row start

    # Position of each (sorted) row in the padded, group-aligned layout.
    pos = tile_base[js] + (jnp.arange(B, dtype=jnp.int32) - grp_base[js])
    x_pad = jnp.zeros((bp, INp), cdt).at[pos].set(x[order])

    # Per-tile judge id and valid-row count (trailing unused tiles -> 0 rows).
    t_idx = jnp.arange(nt, dtype=jnp.int32)
    owner = jnp.searchsorted(cum_tiles, t_idx, side="right").astype(jnp.int32)
    in_range = owner < J
    tile_judge = jnp.minimum(owner, J - 1)
    tile_rows = jnp.where(
        in_range,
        jnp.clip(counts[tile_judge] - (t_idx - first_tile[tile_judge]) * tm, 0, tm),
        0).astype(jnp.int32)

    w_bytes = sum(int(w.size) * w.dtype.itemsize
                  for w in (W1m, b1, W2m, b2, Vm, bv))
    cost = pl.CostEstimate(
        flops=2 * bp * (INp * LP1 + LP1 * LP2 + LP2 * QAp),
        transcendentals=bp * (LP1 + LP2),
        bytes_accessed=bp * INp * x_pad.dtype.itemsize + w_bytes + bp * QAp * 4)

    out_pad = pl.pallas_call(
        _pcn_kernel,
        out_shape=jax.ShapeDtypeStruct((bp, QAp), jnp.float32),
        grid_spec=pltpu.PrefetchScalarGridSpec(
            num_scalar_prefetch=2,        # tile_judge, tile_rows -> SMEM
            grid=(nt,),
            in_specs=[
                # activations: one TM-row tile per grid step
                pl.BlockSpec((tm, INp), lambda t, tj, nr: (t, 0)),
                # all judges' folded weights/biases resident in VMEM:
                # constant index_map -> a single DMA for the whole grid
                pl.BlockSpec((J, INp, LP1), lambda t, tj, nr: (0, 0, 0)),
                pl.BlockSpec((J, 1, LP1), lambda t, tj, nr: (0, 0, 0)),
                pl.BlockSpec((J, LP1, LP2), lambda t, tj, nr: (0, 0, 0)),
                pl.BlockSpec((J, 1, LP2), lambda t, tj, nr: (0, 0, 0)),
                pl.BlockSpec((J, LP2, QAp), lambda t, tj, nr: (0, 0, 0)),
                pl.BlockSpec((J, 1, QAp), lambda t, tj, nr: (0, 0, 0)),
            ],
            out_specs=pl.BlockSpec((tm, QAp), lambda t, tj, nr: (t, 0)),
        ),
        compiler_params=pltpu.CompilerParams(
            dimension_semantics=("parallel",)),   # batch tiles are independent
        cost_estimate=cost,
    )(tile_judge, tile_rows, x_pad, W1m, b1, W2m, b2, Vm, bv)

    # Gather valid rows back into original batch order; drop lane padding.
    pos_of_row = jnp.zeros((B,), jnp.int32).at[order].set(pos)
    out = out_pad[pos_of_row][:, :qa]
    return out.reshape(B, q, a)


# --------------------------------------------------------------------------- #
# Pure-JAX reference matching the PyTorch forward exactly.
# --------------------------------------------------------------------------- #
def reference_forward(X, judges_col, W1, W1a, W2, W2a, V, Va):
    B = X.shape[0]
    hi = jax.lax.Precision.HIGHEST
    bias = jnp.ones((B, 1), jnp.float32)
    j = judges_col[:, 0]
    xb = jnp.concatenate([X, bias], axis=1)
    z1 = jax.nn.sigmoid(jnp.einsum('bi,bio->bo', xb, W1[None] + W1a[j], precision=hi))
    z1b = jnp.concatenate([z1, bias], axis=1)
    z2 = jax.nn.sigmoid(jnp.einsum('bi,bio->bo', z1b, W2[None] + W2a[j], precision=hi))
    z2b = jnp.concatenate([z2, bias], axis=1)
    return jnp.einsum('bi,bqia->bqa', z2b, V[None] + Va[j], precision=hi)


if __name__ == "__main__":
    # Small hyperparameters consistent with the module's __init__ shapes.
    input_size, output_size = 16, 8
    num_judges, num_answers = 4, 4
    layer1_size, layer2_size = 32, 32
    batch = 37   # non-multiple of the tile, multiple judges -> exercises grouping

    key = jax.random.PRNGKey(0)
    ks = jax.random.split(key, 8)
    W1 = 0.1 * jax.random.normal(ks[0], (input_size + 1, layer1_size), jnp.float32)
    W1a = 0.1 * jax.random.normal(ks[1], (num_judges, input_size + 1, layer1_size), jnp.float32)
    W2 = 0.1 * jax.random.normal(ks[2], (layer1_size + 1, layer2_size), jnp.float32)
    W2a = 0.1 * jax.random.normal(ks[3], (num_judges, layer1_size + 1, layer2_size), jnp.float32)
    V = 0.1 * jax.random.normal(ks[4], (output_size, layer2_size + 1, num_answers), jnp.float32)
    Va = 0.1 * jax.random.normal(ks[5], (num_judges, output_size, layer2_size + 1, num_answers), jnp.float32)

    X_machine_evals = jax.random.normal(ks[6], (batch, input_size), jnp.float32)
    X_human_judges = jax.random.randint(ks[7], (batch, 1), 0, num_judges, jnp.int32)

    ref = reference_forward(X_machine_evals, X_human_judges, W1, W1a, W2, W2a, V, Va)
    ref = jax.block_until_ready(ref)

    # f32 operands, large tile (generic path; tolerance documents MXU f32 passes).
    params_f32 = jax.block_until_ready(
        fold_params(W1, W1a, W2, W2a, V, Va, jnp.float32))
    out_f32 = jax.block_until_ready(
        pcn_forward(params_f32, X_machine_evals, X_human_judges,
                    q=output_size, a=num_answers, tm=512))
    assert out_f32.shape == (batch, output_size, num_answers)
    assert float(jnp.max(jnp.abs(out_f32 - ref))) < 2e-3, "f32 path mismatch"

    # bf16 operands (v6e/v7x MXU-native), f32 accumulation, small tile for tiny B.
    params_bf16 = jax.block_until_ready(
        fold_params(W1, W1a, W2, W2a, V, Va, jnp.bfloat16))
    out_bf16 = jax.block_until_ready(
        pcn_forward(params_bf16, X_machine_evals, X_human_judges,
                    q=output_size, a=num_answers, tm=128))
    assert out_bf16.shape == (batch, output_size, num_answers)
    assert float(jnp.max(jnp.abs(out_bf16 - ref))) < 5e-2, "bf16 path mismatch"

    print("KERNEL_OK")
</pallas_src>

<mosaic_0001>
module attributes {stable_mosaic.version = 11 : i64} {
  func.func @_pcn_kernel(%arg0: i32, %arg1: memref<5xi32, #tpu.memory_space<smem>>, %arg2: memref<5xi32, #tpu.memory_space<smem>>, %arg3: memref<512x16xf32, #tpu.memory_space<vmem>>, %arg4: memref<4x16x32xf32, #tpu.memory_space<vmem>>, %arg5: memref<4x1x32xf32, #tpu.memory_space<vmem>>, %arg6: memref<4x32x32xf32, #tpu.memory_space<vmem>>, %arg7: memref<4x1x32xf32, #tpu.memory_space<vmem>>, %arg8: memref<4x32x128xf32, #tpu.memory_space<vmem>>, %arg9: memref<4x1x128xf32, #tpu.memory_space<vmem>>, %arg10: memref<512x128xf32, #tpu.memory_space<vmem>>) attributes {dimension_semantics = [#tpu.dimension_semantics<parallel>], iteration_bounds = array<i64: 5>, scalar_prefetch = 2 : i64, scratch_operands = 0 : i64, tpu.core_type = #tpu.core_type<tc>, window_params = [{transform_indices = @transform_0, window_bounds = array<i64: 512, 16>}, {pipeline_mode = #tpu.pipeline_mode<synchronous>, transform_indices = @transform_1, window_bounds = array<i64: 4, 16, 32>}, {pipeline_mode = #tpu.pipeline_mode<synchronous>, transform_indices = @transform_2, window_bounds = array<i64: 4, 1, 32>}, {pipeline_mode = #tpu.pipeline_mode<synchronous>, transform_indices = @transform_3, window_bounds = array<i64: 4, 32, 32>}, {pipeline_mode = #tpu.pipeline_mode<synchronous>, transform_indices = @transform_4, window_bounds = array<i64: 4, 1, 32>}, {pipeline_mode = #tpu.pipeline_mode<synchronous>, transform_indices = @transform_5, window_bounds = array<i64: 4, 32, 128>}, {pipeline_mode = #tpu.pipeline_mode<synchronous>, transform_indices = @transform_6, window_bounds = array<i64: 4, 1, 128>}, {transform_indices = @transform_7, window_bounds = array<i64: 512, 128>}]} {
    %0 = arith.index_cast %arg0 : i32 to index
    %1 = memref.load %arg1[%0] : memref<5xi32, #tpu.memory_space<smem>>
    %2 = arith.index_cast %arg0 : i32 to index
    %3 = memref.load %arg2[%2] : memref<5xi32, #tpu.memory_space<smem>>
    %c0_i32 = arith.constant 0 : i32
    %4 = arith.cmpi eq, %3, %c0_i32 : i32
    %5 = arith.extui %4 : i1 to i32
    %c0_i32_0 = arith.constant 0 : i32
    %6 = arith.cmpi ne, %5, %c0_i32_0 : i32
    scf.if %6 {
      %cst = arith.constant 0.000000e+00 : f32
      %10 = vector.broadcast %cst : f32 to vector<512x128xf32>
      %c0 = arith.constant 0 : index
      %c0_3 = arith.constant 0 : index
      %11 = vector.load %arg10[%c0, %c0_3] : memref<512x128xf32, #tpu.memory_space<vmem>>, vector<512x128xf32>
      tpu.vector_store %arg10[%c0, %c0_3], %10 {strides = array<i32>} : memref<512x128xf32, #tpu.memory_space<vmem>>, vector<512x128xf32>,
    } else {
    }
    %c0_i32_1 = arith.constant 0 : i32
    %7 = arith.cmpi sgt, %3, %c0_i32_1 : i32
    %8 = arith.extui %7 : i1 to i32
    %c0_i32_2 = arith.constant 0 : i32
    %9 = arith.cmpi ne, %8, %c0_i32_2 : i32
    scf.if %9 {
      %c0 = arith.constant 0 : index
      %c0_3 = arith.constant 0 : index
      %10 = vector.load %arg3[%c0, %c0_3] : memref<512x16xf32, #tpu.memory_space<vmem>>, vector<512x16xf32>
      %11 = arith.index_cast %1 : i32 to index
      %c0_4 = arith.constant 0 : index
      %c0_5 = arith.constant 0 : index
      %12 = vector.load %arg4[%11, %c0_4, %c0_5] : memref<4x16x32xf32, #tpu.memory_space<vmem>>, vector<1x16x32xf32>
      %13 = vector.shape_cast %12 : vector<1x16x32xf32> to vector<16x32xf32>
      %cst = arith.constant dense<0.000000e+00> : vector<512x32xf32>
      %14 = tpu.matmul %10, %13, %cst {dimension_numbers = #tpu.dot_dimension_numbers<[1], [0], [0], [1], [0, 0, 1, 1], [], []>} : vector<512x16xf32>, vector<16x32xf32>, vector<512x32xf32> -> vector<512x32xf32>
      %15 = arith.index_cast %1 : i32 to index
      %c0_6 = arith.constant 0 : index
      %c0_7 = arith.constant 0 : index
      %16 = vector.load %arg5[%15, %c0_6, %c0_7] : memref<4x1x32xf32, #tpu.memory_space<vmem>>, vector<1x1x32xf32>
      %17 = vector.shape_cast %16 : vector<1x1x32xf32> to vector<1x32xf32>
      %18 = vector.broadcast %17 : vector<1x32xf32> to vector<512x32xf32>
      %19 = arith.addf %14, %18 : vector<512x32xf32>
      %20 = arith.negf %19 : vector<512x32xf32>
      %21 = math.exp %20 : vector<512x32xf32>
      %cst_8 = arith.constant 1.000000e+00 : f32
      %22 = vector.broadcast %cst_8 : f32 to vector<512x32xf32>
      %23 = arith.addf %22, %21 : vector<512x32xf32>
      %24 = arith.divf %22, %23 : vector<512x32xf32>
      %25 = arith.index_cast %1 : i32 to index
      %c0_9 = arith.constant 0 : index
      %c0_10 = arith.constant 0 : index
      %26 = vector.load %arg6[%25, %c0_9, %c0_10] : memref<4x32x32xf32, #tpu.memory_space<vmem>>, vector<1x32x32xf32>
      %27 = vector.shape_cast %26 : vector<1x32x32xf32> to vector<32x32xf32>
      %cst_11 = arith.constant dense<0.000000e+00> : vector<512x32xf32>
      %28 = tpu.matmul %24, %27, %cst_11 {dimension_numbers = #tpu.dot_dimension_numbers<[1], [0], [0], [1], [0, 0, 1, 1], [], []>} : vector<512x32xf32>, vector<32x32xf32>, vector<512x32xf32> -> vector<512x32xf32>
      %29 = arith.index_cast %1 : i32 to index
      %c0_12 = arith.constant 0 : index
      %c0_13 = arith.constant 0 : index
      %30 = vector.load %arg7[%29, %c0_12, %c0_13] : memref<4x1x32xf32, #tpu.memory_space<vmem>>, vector<1x1x32xf32>
      %31 = vector.shape_cast %30 : vector<1x1x32xf32> to vector<1x32xf32>
      %32 = vector.broadcast %31 : vector<1x32xf32> to vector<512x32xf32>
      %33 = arith.addf %28, %32 : vector<512x32xf32>
      %34 = arith.negf %33 : vector<512x32xf32>
      %35 = math.exp %34 : vector<512x32xf32>
      %cst_14 = arith.constant 1.000000e+00 : f32
      %36 = vector.broadcast %cst_14 : f32 to vector<512x32xf32>
      %37 = arith.addf %36, %35 : vector<512x32xf32>
      %38 = arith.divf %36, %37 : vector<512x32xf32>
      %39 = arith.index_cast %1 : i32 to index
      %c0_15 = arith.constant 0 : index
      %c0_16 = arith.constant 0 : index
      %40 = vector.load %arg8[%39, %c0_15, %c0_16] : memref<4x32x128xf32, #tpu.memory_space<vmem>>, vector<1x32x128xf32>
      %41 = vector.shape_cast %40 : vector<1x32x128xf32> to vector<32x128xf32>
      %cst_17 = arith.constant dense<0.000000e+00> : vector<512x128xf32>
      %42 = tpu.matmul %38, %41, %cst_17 {dimension_numbers = #tpu.dot_dimension_numbers<[1], [0], [0], [1], [0, 0, 1, 1], [], []>} : vector<512x32xf32>, vector<32x128xf32>, vector<512x128xf32> -> vector<512x128xf32>
      %43 = arith.index_cast %1 : i32 to index
      %c0_18 = arith.constant 0 : index
      %c0_19 = arith.constant 0 : index
      %44 = vector.load %arg9[%43, %c0_18, %c0_19] : memref<4x1x128xf32, #tpu.memory_space<vmem>>, vector<1x1x128xf32>
      %45 = vector.shape_cast %44 : vector<1x1x128xf32> to vector<1x128xf32>
      %46 = vector.broadcast %45 : vector<1x128xf32> to vector<512x128xf32>
      %47 = arith.addf %42, %46 : vector<512x128xf32>
      %c0_20 = arith.constant 0 : index
      %c0_21 = arith.constant 0 : index
      %48 = vector.load %arg10[%c0_20, %c0_21] : memref<512x128xf32, #tpu.memory_space<vmem>>, vector<512x128xf32>
      tpu.vector_store %arg10[%c0_20, %c0_21], %47 {strides = array<i32>} : memref<512x128xf32, #tpu.memory_space<vmem>>, vector<512x128xf32>,
    } else {
    }
    return
  }
  func.func @transform_0(%arg0: i32, %arg1: memref<5xi32, #tpu.memory_space<smem>>, %arg2: memref<5xi32, #tpu.memory_space<smem>>) -> (i32, i32) {
    %c0_i32 = arith.constant 0 : i32
    %c0_i32_0 = arith.constant 0 : i32
    return %arg0, %c0_i32 : i32, i32
  }
  func.func @transform_1(%arg0: i32, %arg1: memref<5xi32, #tpu.memory_space<smem>>, %arg2: memref<5xi32, #tpu.memory_space<smem>>) -> (i32, i32, i32) {
    %c0_i32 = arith.constant 0 : i32
    %c0_i32_0 = arith.constant 0 : i32
    %c0_i32_1 = arith.constant 0 : i32
    %c0_i32_2 = arith.constant 0 : i32
    return %c0_i32, %c0_i32_0, %c0_i32_1 : i32, i32, i32
  }
  func.func @transform_2(%arg0: i32, %arg1: memref<5xi32, #tpu.memory_space<smem>>, %arg2: memref<5xi32, #tpu.memory_space<smem>>) -> (i32, i32, i32) {
    %c0_i32 = arith.constant 0 : i32
    %c0_i32_0 = arith.constant 0 : i32
    %c0_i32_1 = arith.constant 0 : i32
    %c0_i32_2 = arith.constant 0 : i32
    return %c0_i32, %c0_i32_0, %c0_i32_1 : i32, i32, i32
  }
  func.func @transform_3(%arg0: i32, %arg1: memref<5xi32, #tpu.memory_space<smem>>, %arg2: memref<5xi32, #tpu.memory_space<smem>>) -> (i32, i32, i32) {
    %c0_i32 = arith.constant 0 : i32
    %c0_i32_0 = arith.constant 0 : i32
    %c0_i32_1 = arith.constant 0 : i32
    %c0_i32_2 = arith.constant 0 : i32
    return %c0_i32, %c0_i32_0, %c0_i32_1 : i32, i32, i32
  }
  func.func @transform_4(%arg0: i32, %arg1: memref<5xi32, #tpu.memory_space<smem>>, %arg2: memref<5xi32, #tpu.memory_space<smem>>) -> (i32, i32, i32) {
    %c0_i32 = arith.constant 0 : i32
    %c0_i32_0 = arith.constant 0 : i32
    %c0_i32_1 = arith.constant 0 : i32
    %c0_i32_2 = arith.constant 0 : i32
    return %c0_i32, %c0_i32_0, %c0_i32_1 : i32, i32, i32
  }
  func.func @transform_5(%arg0: i32, %arg1: memref<5xi32, #tpu.memory_space<smem>>, %arg2: memref<5xi32, #tpu.memory_space<smem>>) -> (i32, i32, i32) {
    %c0_i32 = arith.constant 0 : i32
    %c0_i32_0 = arith.constant 0 : i32
    %c0_i32_1 = arith.constant 0 : i32
    %c0_i32_2 = arith.constant 0 : i32
    return %c0_i32, %c0_i32_0, %c0_i32_1 : i32, i32, i32
  }
  func.func @transform_6(%arg0: i32, %arg1: memref<5xi32, #tpu.memory_space<smem>>, %arg2: memref<5xi32, #tpu.memory_space<smem>>) -> (i32, i32, i32) {
    %c0_i32 = arith.constant 0 : i32
    %c0_i32_0 = arith.constant 0 : i32
    %c0_i32_1 = arith.constant 0 : i32
    %c0_i32_2 = arith.constant 0 : i32
    return %c0_i32, %c0_i32_0, %c0_i32_1 : i32, i32, i32
  }
  func.func @transform_7(%arg0: i32, %arg1: memref<5xi32, #tpu.memory_space<smem>>, %arg2: memref<5xi32, #tpu.memory_space<smem>>) -> (i32, i32) {
    %c0_i32 = arith.constant 0 : i32
    %c0_i32_0 = arith.constant 0 : i32
    return %arg0, %c0_i32 : i32, i32
  }
}

</mosaic_0001>

<llo_original>
// kernel: custom-call
$region0: #{custom-call}
  %s0 = inlined_call_operand.vmem [shape: u32[5], index: 0, kind: output, shape index: {}]

// kernel: pcn_forward.1
$region0: #{pcn_forward.1}
  #allocation0 [shape = 'u32[]', space=smem, size = 0x4, offset = 0x4, fixed_abs, tag = 'smem constant byte address 0x4 - core index']
  #allocation1 [shape = 'u32[144,128]{1,0:T(1,128)}', space=vmem, size = 0x12000, scoped, tag = 'internal scratch']
  #allocation2 [shape = 's32[1]{0}', space=sflag, size = 0x4, scoped, tag = 'scoped memory for pcn_forward.1']
  #allocation3 [shape = 'u8[512]{0}', space=smem, size = 0x200, scoped, tag = 'prefetched SMEM operand 0']
  #allocation4 [shape = 'u8[512]{0}', space=smem, size = 0x200, scoped, tag = 'prefetched SMEM operand 1']
  %s0 = inlined_call_operand.vmem [shape: s32[5], index: 0, kind: input, shape index: {}]
  %s1 = inlined_call_operand.vmem [shape: s32[5], index: 1, kind: input, shape index: {}]
  %s2 = inlined_call_operand.vmem [shape: f32[2560,16], index: 2, kind: input, shape index: {}]
  %s3 = inlined_call_operand.vmem [shape: f32[4,16,32], index: 3, kind: input, shape index: {}]
  %s4 = inlined_call_operand.vmem [shape: f32[4,1,32], index: 4, kind: input, shape index: {}]
  %s5 = inlined_call_operand.vmem [shape: f32[4,32,32], index: 5, kind: input, shape index: {}]
  %s6 = inlined_call_operand.vmem [shape: f32[4,1,32], index: 6, kind: input, shape index: {}]
  %s7 = inlined_call_operand.vmem [shape: f32[4,32,128], index: 7, kind: input, shape index: {}]
  %s8 = inlined_call_operand.vmem [shape: f32[4,1,128], index: 8, kind: input, shape index: {}]
  %s9 = inlined_call_operand.vmem [shape: f32[2560,128], index: 9, kind: output, shape index: {}]
  %s10 = sld [smem:[#allocation0]]
  $region69: #{pcn_forward.1} parent=0
    _
  %s12 = ssub.s32 1, %s10
  %s13 = scalar_select 0, %s12, %s10
  %s14 = sshll.u32 %s0, 4
  %s15 = int_to_ptr.vmem [resolvable:$true] %s14
  %17 = dma.vmem_to_smem %s15, 16, [#allocation3], [#allocation2]
  %s18 = sshll.u32 %s1, 4
  %s19 = int_to_ptr.vmem [resolvable:$true] %s18
  %21 = dma.vmem_to_smem %s19, 16, [#allocation4], [#allocation2]
  %22 = dma.done [#allocation2], 32
  %23 = sfence
  loop: start=0, step=1, limit=7
  $region2: #{pcn_forward.1} parent=0 // loop_pre_header
    _
  $region3: #{pcn_forward.1} parent=0 // loop_header
    %s25 = sphi 0, %s29
    %p26 = scmp.ge.s32.totalorder %s25, 7
    %s35 = sphi 0, %s37
    %s38 = sphi 0, %s35
    %s39 = sphi 0, %s38
    %s55 = sphi 0, %s39
    %s59 = sphi 0, %s59
    %s61 = sphi 0, %s59
    %s62 = sphi 0, %s61
    %s76 = sphi 0, %s62
    %s80 = sphi 0, %s80
    %s82 = sphi 0, %s80
    %s83 = sphi 0, %s82
    %s97 = sphi 0, %s83
    %s101 = sphi 0, %s101
    %s103 = sphi 0, %s101
    %s104 = sphi 0, %s103
    %s118 = sphi 0, %s104
    %s122 = sphi 0, %s122
    %s124 = sphi 0, %s122
    %s125 = sphi 0, %s124
    %s139 = sphi 0, %s125
    %s143 = sphi 0, %s143
    %s145 = sphi 0, %s143
    %s146 = sphi 0, %s145
    %s160 = sphi 0, %s146
    %s164 = sphi 0, %s164
    %s166 = sphi 0, %s164
    %s167 = sphi 0, %s166
    %s181 = sphi 0, %s167
    %s187 = sphi 0, %s189
    %s190 = sphi 0, %s187
    %s191 = sphi 0, %s190
    %s207 = sphi 0, %s191
  $region4: #{pcn_forward.1} parent=0 // loop_header_branch
    %28 = sbr.rel (%p26) target = $region8
  $region5: #{pcn_forward.1} parent=0 // loop_body
    %s30 = ssub.s32 %s25, 1
    %s31 = ssub.s32 %s25, 2
    %s32 = sadd.s32 %s25, 1
    %s33 = ssub.s32 %s25, %s32
    %p34 = scmp.eq.s32.totalorder %s33, 0
    %s36 = sadd.s32 %s35, 1
    %s37 = scalar_select %p34, %s35, %s36
    %p40 = pneg %p34
    %p41 = scmp.eq.s32.totalorder %s25, 4
    %p42 = por %p40, %p41
    %p43 = scmp.ne.s32.totalorder %s35, %s38
    %p44 = scmp.eq.s32.totalorder %s25, 0
    %p45 = por %p43, %p44
    %p46 = scmp.ne.s32.totalorder %s35, %s38
    %p47 = scmp.eq.s32.totalorder %s30, 4
    %p48 = por %p46, %p47
    %p49 = scmp.ne.s32.totalorder %s38, %s39
    %p50 = scmp.eq.s32.totalorder %s30, 0
    %p51 = por %p49, %p50
    %p52 = scmp.ne.s32.totalorder %s38, %s39
    %p53 = scmp.eq.s32.totalorder %s31, 4
    %p54 = por %p52, %p53
    %p56 = scmp.ne.s32.totalorder %s39, %s55
    %p57 = scmp.eq.s32.totalorder %s31, 0
    %p58 = por %p56, %p57
    %s60 = sadd.s32 %s59, 1
    %p63 = scmp.eq.s32.totalorder %s25, 4
    %p64 = scmp.ne.s32.totalorder %s59, %s61
    %p65 = scmp.eq.s32.totalorder %s25, 0
    %p66 = por %p64, %p65
    %p67 = scmp.ne.s32.totalorder %s59, %s61
    %p68 = scmp.eq.s32.totalorder %s30, 4
    %p69 = por %p67, %p68
    %p70 = scmp.ne.s32.totalorder %s61, %s62
    %p71 = scmp.eq.s32.totalorder %s30, 0
    %p72 = por %p70, %p71
    %p73 = scmp.ne.s32.totalorder %s61, %s62
    %p74 = scmp.eq.s32.totalorder %s31, 4
    %p75 = por %p73, %p74
    %p77 = scmp.ne.s32.totalorder %s62, %s76
    %p78 = scmp.eq.s32.totalorder %s31, 0
    %p79 = por %p77, %p78
    %s81 = sadd.s32 %s80, 1
    %p84 = scmp.eq.s32.totalorder %s25, 4
    %p85 = scmp.ne.s32.totalorder %s80, %s82
    %p86 = scmp.eq.s32.totalorder %s25, 0
    %p87 = por %p85, %p86
    %p88 = scmp.ne.s32.totalorder %s80, %s82
    %p89 = scmp.eq.s32.totalorder %s30, 4
    %p90 = por %p88, %p89
    %p91 = scmp.ne.s32.totalorder %s82, %s83
    %p92 = scmp.eq.s32.totalorder %s30, 0
    %p93 = por %p91, %p92
    %p94 = scmp.ne.s32.totalorder %s82, %s83
    %p95 = scmp.eq.s32.totalorder %s31, 4
    %p96 = por %p94, %p95
    %p98 = scmp.ne.s32.totalorder %s83, %s97
    %p99 = scmp.eq.s32.totalorder %s31, 0
    %p100 = por %p98, %p99
    %s102 = sadd.s32 %s101, 1
    %p105 = scmp.eq.s32.totalorder %s25, 4
    %p106 = scmp.ne.s32.totalorder %s101, %s103
    %p107 = scmp.eq.s32.totalorder %s25, 0
    %p108 = por %p106, %p107
    %p109 = scmp.ne.s32.totalorder %s101, %s103
    %p110 = scmp.eq.s32.totalorder %s30, 4
    %p111 = por %p109, %p110
    %p112 = scmp.ne.s32.totalorder %s103, %s104
    %p113 = scmp.eq.s32.totalorder %s30, 0
    %p114 = por %p112, %p113
    %p115 = scmp.ne.s32.totalorder %s103, %s104
    %p116 = scmp.eq.s32.totalorder %s31, 4
    %p117 = por %p115, %p116
    %p119 = scmp.ne.s32.totalorder %s104, %s118
    %p120 = scmp.eq.s32.totalorder %s31, 0
    %p121 = por %p119, %p120
    %s123 = sadd.s32 %s122, 1
    %p126 = scmp.eq.s32.totalorder %s25, 4
    %p127 = scmp.ne.s32.totalorder %s122, %s124
    %p128 = scmp.eq.s32.totalorder %s25, 0
    %p129 = por %p127, %p128
    %p130 = scmp.ne.s32.totalorder %s122, %s124
    %p131 = scmp.eq.s32.totalorder %s30, 4
    %p132 = por %p130, %p131
    %p133 = scmp.ne.s32.totalorder %s124, %s125
    %p134 = scmp.eq.s32.totalorder %s30, 0
    %p135 = por %p133, %p134
    %p136 = scmp.ne.s32.totalorder %s124, %s125
    %p137 = scmp.eq.s32.totalorder %s31, 4
    %p138 = por %p136, %p137
    %p140 = scmp.ne.s32.totalorder %s125, %s139
    %p141 = scmp.eq.s32.totalorder %s31, 0
    %p142 = por %p140, %p141
    %s144 = sadd.s32 %s143, 1
    %p147 = scmp.eq.s32.totalorder %s25, 4
    %p148 = scmp.ne.s32.totalorder %s143, %s145
    %p149 = scmp.eq.s32.totalorder %s25, 0
    %p150 = por %p148, %p149
    %p151 = scmp.ne.s32.totalorder %s143, %s145
    %p152 = scmp.eq.s32.totalorder %s30, 4
    %p153 = por %p151, %p152
    %p154 = scmp.ne.s32.totalorder %s145, %s146
    %p155 = scmp.eq.s32.totalorder %s30, 0
    %p156 = por %p154, %p155
    %p157 = scmp.ne.s32.totalorder %s145, %s146
    %p158 = scmp.eq.s32.totalorder %s31, 4
    %p159 = por %p157, %p158
    %p161 = scmp.ne.s32.totalorder %s146, %s160
    %p162 = scmp.eq.s32.totalorder %s31, 0
    %p163 = por %p161, %p162
    %s165 = sadd.s32 %s164, 1
    %p168 = scmp.eq.s32.totalorder %s25, 4
    %p169 = scmp.ne.s32.totalorder %s164, %s166
    %p170 = scmp.eq.s32.totalorder %s25, 0
    %p171 = por %p169, %p170
    %p172 = scmp.ne.s32.totalorder %s164, %s166
    %p173 = scmp.eq.s32.totalorder %s30, 4
    %p174 = por %p172, %p173
    %p175 = scmp.ne.s32.totalorder %s166, %s167
    %p176 = scmp.eq.s32.totalorder %s30, 0
    %p177 = por %p175, %p176
    %p178 = scmp.ne.s32.totalorder %s166, %s167
    %p179 = scmp.eq.s32.totalorder %s31, 4
    %p180 = por %p178, %p179
    %p182 = scmp.ne.s32.totalorder %s167, %s181
    %p183 = scmp.eq.s32.totalorder %s31, 0
    %p184 = por %p182, %p183
    %s185 = ssub.s32 %s25, %s32
    %p186 = scmp.eq.s32.totalorder %s185, 0
    %s188 = sadd.s32 %s187, 1
    %s189 = scalar_select %p186, %s187, %s188
    %p192 = pneg %p186
    %p193 = scmp.eq.s32.totalorder %s25, 4
    %p194 = por %p192, %p193
    %p195 = scmp.ne.s32.totalorder %s187, %s190
    %p196 = scmp.eq.s32.totalorder %s25, 0
    %p197 = por %p195, %p196
    %p198 = scmp.ne.s32.totalorder %s187, %s190
    %p199 = scmp.eq.s32.totalorder %s30, 4
    %p200 = por %p198, %p199
    %p201 = scmp.ne.s32.totalorder %s190, %s191
    %p202 = scmp.eq.s32.totalorder %s30, 0
    %p203 = por %p201, %p202
    %p204 = scmp.ne.s32.totalorder %s190, %s191
    %p205 = scmp.eq.s32.totalorder %s31, 4
    %p206 = por %p204, %p205
    %p208 = scmp.ne.s32.totalorder %s191, %s207
    %p209 = scmp.eq.s32.totalorder %s31, 0
    %p210 = por %p208, %p209
    %p211 = scmp.le.s32.totalorder 1, %s25
    %p212 = scmp.lt.s32.totalorder %s25, 6
    %p213 = pnand %p211, %p212
    %p214 = pneg %p213
    // Predicated region
    $region9: #{pcn_forward.1} parent=5 // pred_check
      _
    $region10: #{pcn_forward.1} parent=5 // pred_check_branch
      %216 = sbr.rel (%p213) target = $region12
    $region11: #{pcn_forward.1} parent=5 // pred_region
      %s217 = ssub.s32 %s25, 1
      // Predicated region
      $region13: #{pcn_forward.1} parent=11 // pred_check
        %p218 = pneg %p72
      $region14: #{pcn_forward.1} parent=11 // pred_check_branch
        %220 = sbr.rel (%p218) target = $region16
      $region15: #{pcn_forward.1} parent=11 // pred_region
        _
      $region16: #{pcn_forward.1} parent=11 // pred_fallthru
        _
      // Predicated region
      $region17: #{pcn_forward.1} parent=11 // pred_check
        %p221 = pneg %p93
      $region18: #{pcn_forward.1} parent=11 // pred_check_branch
        %223 = sbr.rel (%p221) target = $region20
      $region19: #{pcn_forward.1} parent=11 // pred_region
        _
      $region20: #{pcn_forward.1} parent=11 // pred_fallthru
        _
      // Predicated region
      $region21: #{pcn_forward.1} parent=11 // pred_check
        %p224 = pneg %p114
      $region22: #{pcn_forward.1} parent=11 // pred_check_branch
        %226 = sbr.rel (%p224) target = $region24
      $region23: #{pcn_forward.1} parent=11 // pred_region
        _
      $region24: #{pcn_forward.1} parent=11 // pred_fallthru
        _
      // Predicated region
      $region25: #{pcn_forward.1} parent=11 // pred_check
        %p227 = pneg %p135
      $region26: #{pcn_forward.1} parent=11 // pred_check_branch
        %229 = sbr.rel (%p227) target = $region28
      $region27: #{pcn_forward.1} parent=11 // pred_region
        _
      $region28: #{pcn_forward.1} parent=11 // pred_fallthru
        _
      // Predicated region
      $region29: #{pcn_forward.1} parent=11 // pred_check
        %p230 = pneg %p156
      $region30: #{pcn_forward.1} parent=11 // pred_check_branch
        %232 = sbr.rel (%p230) target = $region32
      $region31: #{pcn_forward.1} parent=11 // pred_region
        _
      $region32: #{pcn_forward.1} parent=11 // pred_fallthru
        _
      // Predicated region
      $region33: #{pcn_forward.1} parent=11 // pred_check
        %p233 = pneg %p177
      $region34: #{pcn_forward.1} parent=11 // pred_check_branch
        %235 = sbr.rel (%p233) target = $region36
      $region35: #{pcn_forward.1} parent=11 // pred_region
        _
      $region36: #{pcn_forward.1} parent=11 // pred_fallthru
        _
    $region12: #{pcn_forward.1} parent=5 // pred_fallthru
      _
    %p236 = scmp.lt.s32.totalorder %s25, 5
    // Predicated region
    $region37: #{pcn_forward.1} parent=5 // pred_check
      %p237 = pneg %p236
    $region38: #{pcn_forward.1} parent=5 // pred_check_branch
      %239 = sbr.rel (%p237) target = $region40
    $region39: #{pcn_forward.1} parent=5 // pred_region
      // Predicated region
      $region41: #{pcn_forward.1} parent=39 // pred_check
        %p240 = pneg %p45
      $region42: #{pcn_forward.1} parent=39 // pred_check_branch
        %242 = sbr.rel (%p240) target = $region44
      $region43: #{pcn_forward.1} parent=39 // pred_region
        %s243 = smul.u32 64, %s25
        %p244 = scmp.lt.s32.totalorder %s243, 319
        %s245 = scalar_select %p244, %s243, 319
        %s246 = smul.addr %s245, 8
        %s247 = scalar_lea.vmem %s2, %s246
        %s248 = smul.u32 64, %s25
      $region44: #{pcn_forward.1} parent=39 // pred_fallthru
        _
    $region40: #{pcn_forward.1} parent=5 // pred_fallthru
      _
    %p249 = scmp.le.s32.totalorder 1, %s25
    %p250 = scmp.lt.s32.totalorder %s25, 6
    %p251 = pnand %p249, %p250
    %p252 = pneg %p251
    // Predicated region
    $region45: #{pcn_forward.1} parent=5 // pred_check
      _
    $region46: #{pcn_forward.1} parent=5 // pred_check_branch
      %254 = sbr.rel (%p251) target = $region48
    $region47: #{pcn_forward.1} parent=5 // pred_region
      %s255 = ssub.s32 %s25, 1
      %s256 = smul.u32 64, %s30
      %p257 = scmp.lt.s32.totalorder %s256, 319
      %s258 = scalar_select %p257, %s256, 319
      %s259 = smul.addr %s258, 8
      %s260 = scalar_lea.vmem %s2, %s259
      %p261 = pneg %p51
      %p262 = pneg %p48
      %p263 = pneg %p72
      %p264 = pneg %p69
      %p265 = pneg %p93
      %p266 = pneg %p90
      %p267 = pneg %p114
      %p268 = pneg %p111
      %p269 = pneg %p135
      %p270 = pneg %p132
      %p271 = pneg %p156
      %p272 = pneg %p153
      %p273 = pneg %p177
      %p274 = pneg %p174
      %p275 = pneg %p203
      %p276 = pneg %p200
      %s277 = smul.u32 64, %s30
      %p278 = scmp.lt.s32.totalorder %s277, 319
      %s279 = scalar_select %p278, %s277, 319
      %s280 = smul.addr %s279, 8
      %s281 = scalar_lea.vmem %s9, %s280
      %s282 = smul.u32 64, %s30
      %p283 = scmp.lt.s32.totalorder %s282, 319
      %s284 = scalar_select %p283, %s282, 319
      %s285 = smul.addr %s284, 8
      %s286 = scalar_lea.vmem %s2, %s285
      %s287 = smul.u32 64, %s30
      %s288 = smul.u32 64, %s30
      %p289 = scmp.lt.s32.totalorder %s288, 319
      %s290 = scalar_select %p289, %s288, 319
      %s291 = smul.addr %s290, 8
      %s292 = scalar_lea.vmem %s9, %s291
      %s293 = smul.u32 64, %s30
      %s294 = sld [smem:[#allocation3 + %s30]]
      %s295 = sld [smem:[#allocation4 + %s30]]
      %p296 = scmp.eq.s32.totalorder %s295, 0
      // Predicated region
      $region49: #{pcn_forward.1} parent=47 // pred_check
        %p297 = pneg %p296
      $region50: #{pcn_forward.1} parent=47 // pred_check_branch
        %299 = sbr.rel (%p297) target = $region52
      $region51: #{pcn_forward.1} parent=47 // pred_region
        %300 = vst [vmem:[%s292] sm:$0xff] 0.0
        %301 = vst [vmem:[%s292 + $0x8] sm:$0xff] 0.0
        %302 = vst [vmem:[%s292 + $0x10] sm:$0xff] 0.0
        %303 = vst [vmem:[%s292 + $0x18] sm:$0xff] 0.0
        %304 = vst [vmem:[%s292 + $0x20] sm:$0xff] 0.0
        %305 = vst [vmem:[%s292 + $0x28] sm:$0xff] 0.0
        %306 = vst [vmem:[%s292 + $0x30] sm:$0xff] 0.0
        %307 = vst [vmem:[%s292 + $0x38] sm:$0xff] 0.0
        %308 = vst [vmem:[%s292 + $0x40] sm:$0xff] 0.0
        %309 = vst [vmem:[%s292 + $0x48] sm:$0xff] 0.0
        %310 = vst [vmem:[%s292 + $0x50] sm:$0xff] 0.0
        %311 = vst [vmem:[%s292 + $0x58] sm:$0xff] 0.0
        %312 = vst [vmem:[%s292 + $0x60] sm:$0xff] 0.0
        %313 = vst [vmem:[%s292 + $0x68] sm:$0xff] 0.0
        %314 = vst [vmem:[%s292 + $0x70] sm:$0xff] 0.0
        %315 = vst [vmem:[%s292 + $0x78] sm:$0xff] 0.0
        %316 = vst [vmem:[%s292 + $0x80] sm:$0xff] 0.0
        %317 = vst [vmem:[%s292 + $0x88] sm:$0xff] 0.0
        %318 = vst [vmem:[%s292 + $0x90] sm:$0xff] 0.0
        %319 = vst [vmem:[%s292 + $0x98] sm:$0xff] 0.0
        %320 = vst [vmem:[%s292 + $0xa0] sm:$0xff] 0.0
        %321 = vst [vmem:[%s292 + $0xa8] sm:$0xff] 0.0
        %322 = vst [vmem:[%s292 + $0xb0] sm:$0xff] 0.0
        %323 = vst [vmem:[%s292 + $0xb8] sm:$0xff] 0.0
        %324 = vst [vmem:[%s292 + $0xc0] sm:$0xff] 0.0
        %325 = vst [vmem:[%s292 + $0xc8] sm:$0xff] 0.0
        %326 = vst [vmem:[%s292 + $0xd0] sm:$0xff] 0.0
        %327 = vst [vmem:[%s292 + $0xd8] sm:$0xff] 0.0
        %328 = vst [vmem:[%s292 + $0xe0] sm:$0xff] 0.0
        %329 = vst [vmem:[%s292 + $0xe8] sm:$0xff] 0.0
        %330 = vst [vmem:[%s292 + $0xf0] sm:$0xff] 0.0
        %331 = vst [vmem:[%s292 + $0xf8] sm:$0xff] 0.0
        %332 = vst [vmem:[%s292 + $0x100] sm:$0xff] 0.0
        %333 = vst [vmem:[%s292 + $0x108] sm:$0xff] 0.0
        %334 = vst [vmem:[%s292 + $0x110] sm:$0xff] 0.0
        %335 = vst [vmem:[%s292 + $0x118] sm:$0xff] 0.0
        %336 = vst [vmem:[%s292 + $0x120] sm:$0xff] 0.0
        %337 = vst [vmem:[%s292 + $0x128] sm:$0xff] 0.0
        %338 = vst [vmem:[%s292 + $0x130] sm:$0xff] 0.0
        %339 = vst [vmem:[%s292 + $0x138] sm:$0xff] 0.0
        %340 = vst [vmem:[%s292 + $0x140] sm:$0xff] 0.0
        %341 = vst [vmem:[%s292 + $0x148] sm:$0xff] 0.0
        %342 = vst [vmem:[%s292 + $0x150] sm:$0xff] 0.0
        %343 = vst [vmem:[%s292 + $0x158] sm:$0xff] 0.0
        %344 = vst [vmem:[%s292 + $0x160] sm:$0xff] 0.0
        %345 = vst [vmem:[%s292 + $0x168] sm:$0xff] 0.0
        %346 = vst [vmem:[%s292 + $0x170] sm:$0xff] 0.0
        %347 = vst [vmem:[%s292 + $0x178] sm:$0xff] 0.0
        %348 = vst [vmem:[%s292 + $0x180] sm:$0xff] 0.0
        %349 = vst [vmem:[%s292 + $0x188] sm:$0xff] 0.0
        %350 = vst [vmem:[%s292 + $0x190] sm:$0xff] 0.0
        %351 = vst [vmem:[%s292 + $0x198] sm:$0xff] 0.0
        %352 = vst [vmem:[%s292 + $0x1a0] sm:$0xff] 0.0
        %353 = vst [vmem:[%s292 + $0x1a8] sm:$0xff] 0.0
        %354 = vst [vmem:[%s292 + $0x1b0] sm:$0xff] 0.0
        %355 = vst [vmem:[%s292 + $0x1b8] sm:$0xff] 0.0
        %356 = vst [vmem:[%s292 + $0x1c0] sm:$0xff] 0.0
        %357 = vst [vmem:[%s292 + $0x1c8] sm:$0xff] 0.0
        %358 = vst [vmem:[%s292 + $0x1d0] sm:$0xff] 0.0
        %359 = vst [vmem:[%s292 + $0x1d8] sm:$0xff] 0.0
        %360 = vst [vmem:[%s292 + $0x1e0] sm:$0xff] 0.0
        %361 = vst [vmem:[%s292 + $0x1e8] sm:$0xff] 0.0
        %362 = vst [vmem:[%s292 + $0x1f0] sm:$0xff] 0.0
        %363 = vst [vmem:[%s292 + $0x1f8] sm:$0xff] 0.0
      $region52: #{pcn_forward.1} parent=47 // pred_fallthru
        _
      %p364 = scmp.gt.s32.totalorder %s295, 0
      // Predicated region
      $region53: #{pcn_forward.1} parent=47 // pred_check
        %p365 = pneg %p364
      $region54: #{pcn_forward.1} parent=47 // pred_check_branch
        %367 = sbr.rel (%p365) target = $region56
      $region55: #{pcn_forward.1} parent=47 // pred_region
        %v368 = vld [vmem:[%s286] sm:$0xff]
        %v369 = vld [vmem:[%s286 + $0x8] sm:$0xff]
        %v370 = vld [vmem:[%s286 + $0x10] sm:$0xff]
        %v371 = vld [vmem:[%s286 + $0x18] sm:$0xff]
        %v372 = vld [vmem:[%s286 + $0x20] sm:$0xff]
        %v373 = vld [vmem:[%s286 + $0x28] sm:$0xff]
        %v374 = vld [vmem:[%s286 + $0x30] sm:$0xff]
        %v375 = vld [vmem:[%s286 + $0x38] sm:$0xff]
        %v376 = vld [vmem:[%s286 + $0x40] sm:$0xff]
        %v377 = vld [vmem:[%s286 + $0x48] sm:$0xff]
        %v378 = vld [vmem:[%s286 + $0x50] sm:$0xff]
        %v379 = vld [vmem:[%s286 + $0x58] sm:$0xff]
        %v380 = vld [vmem:[%s286 + $0x60] sm:$0xff]
        %v381 = vld [vmem:[%s286 + $0x68] sm:$0xff]
        %v382 = vld [vmem:[%s286 + $0x70] sm:$0xff]
        %v383 = vld [vmem:[%s286 + $0x78] sm:$0xff]
        %v384 = vld [vmem:[%s286 + $0x80] sm:$0xff]
        %v385 = vld [vmem:[%s286 + $0x88] sm:$0xff]
        %v386 = vld [vmem:[%s286 + $0x90] sm:$0xff]
        %v387 = vld [vmem:[%s286 + $0x98] sm:$0xff]
        %v388 = vld [vmem:[%s286 + $0xa0] sm:$0xff]
        %v389 = vld [vmem:[%s286 + $0xa8] sm:$0xff]
        %v390 = vld [vmem:[%s286 + $0xb0] sm:$0xff]
        %v391 = vld [vmem:[%s286 + $0xb8] sm:$0xff]
        %v392 = vld [vmem:[%s286 + $0xc0] sm:$0xff]
        %v393 = vld [vmem:[%s286 + $0xc8] sm:$0xff]
        %v394 = vld [vmem:[%s286 + $0xd0] sm:$0xff]
        %v395 = vld [vmem:[%s286 + $0xd8] sm:$0xff]
        %v396 = vld [vmem:[%s286 + $0xe0] sm:$0xff]
        %v397 = vld [vmem:[%s286 + $0xe8] sm:$0xff]
        %v398 = vld [vmem:[%s286 + $0xf0] sm:$0xff]
        %v399 = vld [vmem:[%s286 + $0xf8] sm:$0xff]
        %v400 = vld [vmem:[%s286 + $0x100] sm:$0xff]
        %v401 = vld [vmem:[%s286 + $0x108] sm:$0xff]
        %v402 = vld [vmem:[%s286 + $0x110] sm:$0xff]
        %v403 = vld [vmem:[%s286 + $0x118] sm:$0xff]
        %v404 = vld [vmem:[%s286 + $0x120] sm:$0xff]
        %v405 = vld [vmem:[%s286 + $0x128] sm:$0xff]
        %v406 = vld [vmem:[%s286 + $0x130] sm:$0xff]
        %v407 = vld [vmem:[%s286 + $0x138] sm:$0xff]
        %v408 = vld [vmem:[%s286 + $0x140] sm:$0xff]
        %v409 = vld [vmem:[%s286 + $0x148] sm:$0xff]
        %v410 = vld [vmem:[%s286 + $0x150] sm:$0xff]
        %v411 = vld [vmem:[%s286 + $0x158] sm:$0xff]
        %v412 = vld [vmem:[%s286 + $0x160] sm:$0xff]
        %v413 = vld [vmem:[%s286 + $0x168] sm:$0xff]
        %v414 = vld [vmem:[%s286 + $0x170] sm:$0xff]
        %v415 = vld [vmem:[%s286 + $0x178] sm:$0xff]
        %v416 = vld [vmem:[%s286 + $0x180] sm:$0xff]
        %v417 = vld [vmem:[%s286 + $0x188] sm:$0xff]
        %v418 = vld [vmem:[%s286 + $0x190] sm:$0xff]
        %v419 = vld [vmem:[%s286 + $0x198] sm:$0xff]
        %v420 = vld [vmem:[%s286 + $0x1a0] sm:$0xff]
        %v421 = vld [vmem:[%s286 + $0x1a8] sm:$0xff]
        %v422 = vld [vmem:[%s286 + $0x1b0] sm:$0xff]
        %v423 = vld [vmem:[%s286 + $0x1b8] sm:$0xff]
        %v424 = vld [vmem:[%s286 + $0x1c0] sm:$0xff]
        %v425 = vld [vmem:[%s286 + $0x1c8] sm:$0xff]
        %v426 = vld [vmem:[%s286 + $0x1d0] sm:$0xff]
        %v427 = vld [vmem:[%s286 + $0x1d8] sm:$0xff]
        %v428 = vld [vmem:[%s286 + $0x1e0] sm:$0xff]
        %v429 = vld [vmem:[%s286 + $0x1e8] sm:$0xff]
        %v430 = vld [vmem:[%s286 + $0x1f0] sm:$0xff]
        %v431 = vld [vmem:[%s286 + $0x1f8] sm:$0xff]
        %s432 = smul.u32 %s294, 16
        %s433 = scalar_lea.vmem %s3, %s432
        %v434 = vld [vmem:[%s433] sm:$0xff]
        %v435 = vld [vmem:[%s433 + $0x8] sm:$0xff]
        %s436 = scalar_lea.vmem %s4, %s294
        %v437 = vld [vmem:[%s436] sm:$0x1]
        %v439 = vlaneseq
        %v440 = vshrl.u32 %v439, 7
        %v441 = vsub.s32 0, %v440
        %v442 = vrot.slane %v437, %v441
        %vm444 = vcmask 130048
        %v446 = vsel %vm444, %v368, 0
        %v449 = vsel %vm444, %v369, 0
        %v452 = vsel %vm444, %v370, 0
        %v455 = vsel %vm444, %v371, 0
        %v458 = vsel %vm444, %v372, 0
        %v461 = vsel %vm444, %v373, 0
        %v464 = vsel %vm444, %v374, 0
        %v467 = vsel %vm444, %v375, 0
        %v470 = vsel %vm444, %v376, 0
        %v473 = vsel %vm444, %v377, 0
        %v476 = vsel %vm444, %v378, 0
        %v479 = vsel %vm444, %v379, 0
        %v482 = vsel %vm444, %v380, 0
        %v485 = vsel %vm444, %v381, 0
        %v488 = vsel %vm444, %v382, 0
        %v491 = vsel %vm444, %v383, 0
        %v494 = vsel %vm444, %v384, 0
        %v497 = vsel %vm444, %v385, 0
        %v500 = vsel %vm444, %v386, 0
        %v503 = vsel %vm444, %v387, 0
        %v506 = vsel %vm444, %v388, 0
        %v509 = vsel %vm444, %v389, 0
        %v512 = vsel %vm444, %v390, 0
        %v515 = vsel %vm444, %v391, 0
        %v518 = vsel %vm444, %v392, 0
        %v521 = vsel %vm444, %v393, 0
        %v524 = vsel %vm444, %v394, 0
        %v527 = vsel %vm444, %v395, 0
        %v530 = vsel %vm444, %v396, 0
        %v533 = vsel %vm444, %v397, 0
        %v536 = vsel %vm444, %v398, 0
        %v539 = vsel %vm444, %v399, 0
        %v542 = vsel %vm444, %v400, 0
        %v545 = vsel %vm444, %v401, 0
        %v548 = vsel %vm444, %v402, 0
        %v551 = vsel %vm444, %v403, 0
        %v554 = vsel %vm444, %v404, 0
        %v557 = vsel %vm444, %v405, 0
        %v560 = vsel %vm444, %v406, 0
        %v563 = vsel %vm444, %v407, 0
        %v566 = vsel %vm444, %v408, 0
        %v569 = vsel %vm444, %v409, 0
        %v572 = vsel %vm444, %v410, 0
        %v575 = vsel %vm444, %v411, 0
        %v578 = vsel %vm444, %v412, 0
        %v581 = vsel %vm444, %v413, 0
        %v584 = vsel %vm444, %v414, 0
        %v587 = vsel %vm444, %v415, 0
        %v590 = vsel %vm444, %v416, 0
        %v593 = vsel %vm444, %v417, 0
        %v596 = vsel %vm444, %v418, 0
        %v599 = vsel %vm444, %v419, 0
        %v602 = vsel %vm444, %v420, 0
        %v605 = vsel %vm444, %v421, 0
        %v608 = vsel %vm444, %v422, 0
        %v611 = vsel %vm444, %v423, 0
        %v614 = vsel %vm444, %v424, 0
        %v617 = vsel %vm444, %v425, 0
        %v620 = vsel %vm444, %v426, 0
        %v623 = vsel %vm444, %v427, 0
        %v626 = vsel %vm444, %v428, 0
        %v629 = vsel %vm444, %v429, 0
        %v632 = vsel %vm444, %v430, 0
        %v635 = vsel %vm444, %v431, 0
        %637 = vmatprep.subr.mxu0 0.0
        %638 = vmatpush1.msra.mxu0 0.0
        %639 = vmatprep.subr.mxu0 0.0
        %640 = vmatpush1.msra.mxu0 0.0
        %641 = vmatprep.subr.mxu0 0.0
        %642 = vmatpush1.msra.mxu0 0.0
        %643 = vmatprep.subr.mxu0 0.0
        %644 = vmatpush1.msra.mxu0 0.0
        %645 = vmatprep.subr.mxu0 0.0
        %646 = vmatpush1.msra.mxu0 0.0
        %647 = vmatprep.subr.mxu0 0.0
        %648 = vmatpush1.msra.mxu0 0.0
        %649 = vmatprep.subr.mxu0 0.0
        %650 = vmatpush1.msra.mxu0 0.0
        %651 = vmatprep.subr.mxu0 0.0
        %652 = vmatpush1.msra.mxu0 0.0
        %653 = vmatprep.subr.mxu0 0.0
        %654 = vmatpush1.msra.mxu0 0.0
        %655 = vmatprep.subr.mxu0 0.0
        %656 = vmatpush1.msra.mxu0 0.0
        %657 = vmatprep.subr.mxu0 0.0
        %658 = vmatpush1.msra.mxu0 0.0
        %659 = vmatprep.subr.mxu0 0.0
        %660 = vmatpush1.msra.mxu0 0.0
        %661 = vmatprep.subr.mxu0 0.0
        %662 = vmatpush1.msra.mxu0 0.0
        %663 = vmatprep.subr.mxu0 0.0
        %664 = vmatpush1.msra.mxu0 0.0
        %665 = vmatprep.subr.mxu0 0.0
        %666 = vmatpush1.msra.mxu0 %v435
        %667 = vmatprep.subr.mxu0 0.0
        %668 = vmatpush1.msra.mxu0 %v434
        %669 = vmatprep.subr.mxu0 0.0
        %670 = vmatpush2.msra.mxu0 0.0
        %671 = vmatprep.subr.mxu0 0.0
        %672 = vmatpush2.msra.mxu0 0.0
        %673 = vmatprep.subr.mxu0 0.0
        %674 = vmatpush2.msra.mxu0 0.0
        %675 = vmatprep.subr.mxu0 0.0
        %676 = vmatpush2.msra.mxu0 0.0
        %677 = vmatprep.subr.mxu0 0.0
        %678 = vmatpush2.msra.mxu0 0.0
        %679 = vmatprep.subr.mxu0 0.0
        %680 = vmatpush2.msra.mxu0 0.0
        %681 = vmatprep.subr.mxu0 0.0
        %682 = vmatpush2.msra.mxu0 0.0
        %683 = vmatprep.subr.mxu0 0.0
        %684 = vmatpush2.msra.mxu0 0.0
        %685 = vmatprep.subr.mxu0 0.0
        %686 = vmatpush2.msra.mxu0 0.0
        %687 = vmatprep.subr.mxu0 0.0
        %688 = vmatpush2.msra.mxu0 0.0
        %689 = vmatprep.subr.mxu0 0.0
        %690 = vmatpush2.msra.mxu0 0.0
        %691 = vmatprep.subr.mxu0 0.0
        %692 = vmatpush2.msra.mxu0 0.0
        %693 = vmatprep.subr.mxu0 0.0
        %694 = vmatpush2.msra.mxu0 0.0
        %695 = vmatprep.subr.mxu0 0.0
        %696 = vmatpush2.msra.mxu0 0.0
        %697 = vmatprep.subr.mxu0 0.0
        %698 = vmatpush2.msra.mxu0 0.0
        %699 = vmatprep.subr.mxu0 0.0
        %700 = vmatpush2.msra.mxu0 0.0
        %701 = vmatprep.mubr.f32.mxu0 0.0
        %702 = vmatmul.mubr.f32.gmra.mxu0 %v446
        %v703 = vpop.f32.mrf.mxu0
        %v704 = vadd.f32 %v442, %v703
        %v705 = vpop.f32.mrf.mxu0
        %706 = vmatprep.mubr.f32.mxu0 0.0
        %707 = vmatmul.mubr.f32.gmra.mxu0 %v449
        %v708 = vpop.f32.mrf.mxu0
        %v709 = vadd.f32 %v442, %v708
        %v710 = vpop.f32.mrf.mxu0
        %711 = vmatprep.mubr.f32.mxu0 0.0
        %712 = vmatmul.mubr.f32.gmra.mxu0 %v452
        %v713 = vpop.f32.mrf.mxu0
        %v714 = vadd.f32 %v442, %v713
        %v715 = vpop.f32.mrf.mxu0
        %716 = vmatprep.mubr.f32.mxu0 0.0
        %717 = vmatmul.mubr.f32.gmra.mxu0 %v455
        %v718 = vpop.f32.mrf.mxu0
        %v719 = vadd.f32 %v442, %v718
        %v720 = vpop.f32.mrf.mxu0
        %721 = vmatprep.mubr.f32.mxu0 0.0
        %722 = vmatmul.mubr.f32.gmra.mxu0 %v458
        %v723 = vpop.f32.mrf.mxu0
        %v724 = vadd.f32 %v442, %v723
        %v725 = vpop.f32.mrf.mxu0
        %726 = vmatprep.mubr.f32.mxu0 0.0
        %727 = vmatmul.mubr.f32.gmra.mxu0 %v461
        %v728 = vpop.f32.mrf.mxu0
        %v729 = vadd.f32 %v442, %v728
        %v730 = vpop.f32.mrf.mxu0
        %731 = vmatprep.mubr.f32.mxu0 0.0
        %732 = vmatmul.mubr.f32.gmra.mxu0 %v464
        %v733 = vpop.f32.mrf.mxu0
        %v734 = vadd.f32 %v442, %v733
        %v735 = vpop.f32.mrf.mxu0
        %736 = vmatprep.mubr.f32.mxu0 0.0
        %737 = vmatmul.mubr.f32.gmra.mxu0 %v467
        %v738 = vpop.f32.mrf.mxu0
        %v739 = vadd.f32 %v442, %v738
        %v740 = vpop.f32.mrf.mxu0
        %741 = vmatprep.mubr.f32.mxu0 0.0
        %742 = vmatmul.mubr.f32.gmra.mxu0 %v470
        %v743 = vpop.f32.mrf.mxu0
        %v744 = vadd.f32 %v442, %v743
        %v745 = vpop.f32.mrf.mxu0
        %746 = vmatprep.mubr.f32.mxu0 0.0
        %747 = vmatmul.mubr.f32.gmra.mxu0 %v473
        %v748 = vpop.f32.mrf.mxu0
        %v749 = vadd.f32 %v442, %v748
        %v750 = vpop.f32.mrf.mxu0
        %751 = vmatprep.mubr.f32.mxu0 0.0
        %752 = vmatmul.mubr.f32.gmra.mxu0 %v476
        %v753 = vpop.f32.mrf.mxu0
        %v754 = vadd.f32 %v442, %v753
        %v755 = vpop.f32.mrf.mxu0
        %756 = vmatprep.mubr.f32.mxu0 0.0
        %757 = vmatmul.mubr.f32.gmra.mxu0 %v479
        %v758 = vpop.f32.mrf.mxu0
        %v759 = vadd.f32 %v442, %v758
        %v760 = vpop.f32.mrf.mxu0
        %761 = vmatprep.mubr.f32.mxu0 0.0
        %762 = vmatmul.mubr.f32.gmra.mxu0 %v482
        %v763 = vpop.f32.mrf.mxu0
        %v764 = vadd.f32 %v442, %v763
        %v765 = vpop.f32.mrf.mxu0
        %766 = vmatprep.mubr.f32.mxu0 0.0
        %767 = vmatmul.mubr.f32.gmra.mxu0 %v485
        %v768 = vpop.f32.mrf.mxu0
        %v769 = vadd.f32 %v442, %v768
        %v770 = vpop.f32.mrf.mxu0
        %771 = vmatprep.mubr.f32.mxu0 0.0
        %772 = vmatmul.mubr.f32.gmra.mxu0 %v488
        %v773 = vpop.f32.mrf.mxu0
        %v774 = vadd.f32 %v442, %v773
        %v775 = vpop.f32.mrf.mxu0
        %776 = vmatprep.mubr.f32.mxu0 0.0
        %777 = vmatmul.mubr.f32.gmra.mxu0 %v491
        %v778 = vpop.f32.mrf.mxu0
        %v779 = vadd.f32 %v442, %v778
        %v780 = vpop.f32.mrf.mxu0
        %781 = vmatprep.mubr.f32.mxu0 0.0
        %782 = vmatmul.mubr.f32.gmra.mxu0 %v494
        %v783 = vpop.f32.mrf.mxu0
        %v784 = vadd.f32 %v442, %v783
        %v785 = vpop.f32.mrf.mxu0
        %786 = vmatprep.mubr.f32.mxu0 0.0
        %787 = vmatmul.mubr.f32.gmra.mxu0 %v497
        %v788 = vpop.f32.mrf.mxu0
        %v789 = vadd.f32 %v442, %v788
        %v790 = vpop.f32.mrf.mxu0
        %791 = vmatprep.mubr.f32.mxu0 0.0
        %792 = vmatmul.mubr.f32.gmra.mxu0 %v500
        %v793 = vpop.f32.mrf.mxu0
        %v794 = vadd.f32 %v442, %v793
        %v795 = vpop.f32.mrf.mxu0
        %796 = vmatprep.mubr.f32.mxu0 0.0
        %797 = vmatmul.mubr.f32.gmra.mxu0 %v503
        %v798 = vpop.f32.mrf.mxu0
        %v799 = vadd.f32 %v442, %v798
        %v800 = vpop.f32.mrf.mxu0
        %801 = vmatprep.mubr.f32.mxu0 0.0
        %802 = vmatmul.mubr.f32.gmra.mxu0 %v506
        %v803 = vpop.f32.mrf.mxu0
        %v804 = vadd.f32 %v442, %v803
        %v805 = vpop.f32.mrf.mxu0
        %806 = vmatprep.mubr.f32.mxu0 0.0
        %807 = vmatmul.mubr.f32.gmra.mxu0 %v509
        %v808 = vpop.f32.mrf.mxu0
        %v809 = vadd.f32 %v442, %v808
        %v810 = vpop.f32.mrf.mxu0
        %811 = vmatprep.mubr.f32.mxu0 0.0
        %812 = vmatmul.mubr.f32.gmra.mxu0 %v512
        %v813 = vpop.f32.mrf.mxu0
        %v814 = vadd.f32 %v442, %v813
        %v815 = vpop.f32.mrf.mxu0
        %816 = vmatprep.mubr.f32.mxu0 0.0
        %817 = vmatmul.mubr.f32.gmra.mxu0 %v515
        %v818 = vpop.f32.mrf.mxu0
        %v819 = vadd.f32 %v442, %v818
        %v820 = vpop.f32.mrf.mxu0
        %821 = vmatprep.mubr.f32.mxu0 0.0
        %822 = vmatmul.mubr.f32.gmra.mxu0 %v518
        %v823 = vpop.f32.mrf.mxu0
        %v824 = vadd.f32 %v442, %v823
        %v825 = vpop.f32.mrf.mxu0
        %826 = vmatprep.mubr.f32.mxu0 0.0
        %827 = vmatmul.mubr.f32.gmra.mxu0 %v521
        %v828 = vpop.f32.mrf.mxu0
        %v829 = vadd.f32 %v442, %v828
        %v830 = vpop.f32.mrf.mxu0
        %831 = vmatprep.mubr.f32.mxu0 0.0
        %832 = vmatmul.mubr.f32.gmra.mxu0 %v524
        %v833 = vpop.f32.mrf.mxu0
        %v834 = vadd.f32 %v442, %v833
        %v835 = vpop.f32.mrf.mxu0
        %836 = vmatprep.mubr.f32.mxu0 0.0
        %837 = vmatmul.mubr.f32.gmra.mxu0 %v527
        %v838 = vpop.f32.mrf.mxu0
        %v839 = vadd.f32 %v442, %v838
        %v840 = vpop.f32.mrf.mxu0
        %841 = vmatprep.mubr.f32.mxu0 0.0
        %842 = vmatmul.mubr.f32.gmra.mxu0 %v530
        %v843 = vpop.f32.mrf.mxu0
        %v844 = vadd.f32 %v442, %v843
        %v845 = vpop.f32.mrf.mxu0
        %846 = vmatprep.mubr.f32.mxu0 0.0
        %847 = vmatmul.mubr.f32.gmra.mxu0 %v533
        %v848 = vpop.f32.mrf.mxu0
        %v849 = vadd.f32 %v442, %v848
        %v850 = vpop.f32.mrf.mxu0
        %851 = vmatprep.mubr.f32.mxu0 0.0
        %852 = vmatmul.mubr.f32.gmra.mxu0 %v536
        %v853 = vpop.f32.mrf.mxu0
        %v854 = vadd.f32 %v442, %v853
        %v855 = vpop.f32.mrf.mxu0
        %856 = vmatprep.mubr.f32.mxu0 0.0
        %857 = vmatmul.mubr.f32.gmra.mxu0 %v539
        %v858 = vpop.f32.mrf.mxu0
        %v859 = vadd.f32 %v442, %v858
        %v860 = vpop.f32.mrf.mxu0
        %861 = vmatprep.mubr.f32.mxu0 0.0
        %862 = vmatmul.mubr.f32.gmra.mxu0 %v542
        %v863 = vpop.f32.mrf.mxu0
        %v864 = vadd.f32 %v442, %v863
        %v865 = vpop.f32.mrf.mxu0
        %866 = vmatprep.mubr.f32.mxu0 0.0
        %867 = vmatmul.mubr.f32.gmra.mxu0 %v545
        %v868 = vpop.f32.mrf.mxu0
        %v869 = vadd.f32 %v442, %v868
        %v870 = vpop.f32.mrf.mxu0
        %871 = vmatprep.mubr.f32.mxu0 0.0
        %872 = vmatmul.mubr.f32.gmra.mxu0 %v548
        %v873 = vpop.f32.mrf.mxu0
        %v874 = vadd.f32 %v442, %v873
        %v875 = vpop.f32.mrf.mxu0
        %876 = vmatprep.mubr.f32.mxu0 0.0
        %877 = vmatmul.mubr.f32.gmra.mxu0 %v551
        %v878 = vpop.f32.mrf.mxu0
        %v879 = vadd.f32 %v442, %v878
        %v880 = vpop.f32.mrf.mxu0
        %881 = vmatprep.mubr.f32.mxu0 0.0
        %882 = vmatmul.mubr.f32.gmra.mxu0 %v554
        %v883 = vpop.f32.mrf.mxu0
        %v884 = vadd.f32 %v442, %v883
        %v885 = vpop.f32.mrf.mxu0
        %886 = vmatprep.mubr.f32.mxu0 0.0
        %887 = vmatmul.mubr.f32.gmra.mxu0 %v557
        %v888 = vpop.f32.mrf.mxu0
        %v889 = vadd.f32 %v442, %v888
        %v890 = vpop.f32.mrf.mxu0
        %891 = vmatprep.mubr.f32.mxu0 0.0
        %892 = vmatmul.mubr.f32.gmra.mxu0 %v560
        %v893 = vpop.f32.mrf.mxu0
        %v894 = vadd.f32 %v442, %v893
        %v895 = vpop.f32.mrf.mxu0
        %896 = vmatprep.mubr.f32.mxu0 0.0
        %897 = vmatmul.mubr.f32.gmra.mxu0 %v563
        %v898 = vpop.f32.mrf.mxu0
        %v899 = vadd.f32 %v442, %v898
        %v900 = vpop.f32.mrf.mxu0
        %901 = vmatprep.mubr.f32.mxu0 0.0
        %902 = vmatmul.mubr.f32.gmra.mxu0 %v566
        %v903 = vpop.f32.mrf.mxu0
        %v904 = vadd.f32 %v442, %v903
        %v905 = vpop.f32.mrf.mxu0
        %906 = vmatprep.mubr.f32.mxu0 0.0
        %907 = vmatmul.mubr.f32.gmra.mxu0 %v569
        %v908 = vpop.f32.mrf.mxu0
        %v909 = vadd.f32 %v442, %v908
        %v910 = vpop.f32.mrf.mxu0
        %911 = vmatprep.mubr.f32.mxu0 0.0
        %912 = vmatmul.mubr.f32.gmra.mxu0 %v572
        %v913 = vpop.f32.mrf.mxu0
        %v914 = vadd.f32 %v442, %v913
        %v915 = vpop.f32.mrf.mxu0
        %916 = vmatprep.mubr.f32.mxu0 0.0
        %917 = vmatmul.mubr.f32.gmra.mxu0 %v575
        %v918 = vpop.f32.mrf.mxu0
        %v919 = vadd.f32 %v442, %v918
        %v920 = vpop.f32.mrf.mxu0
        %921 = vmatprep.mubr.f32.mxu0 0.0
        %922 = vmatmul.mubr.f32.gmra.mxu0 %v578
        %v923 = vpop.f32.mrf.mxu0
        %v924 = vadd.f32 %v442, %v923
        %v925 = vpop.f32.mrf.mxu0
        %926 = vmatprep.mubr.f32.mxu0 0.0
        %927 = vmatmul.mubr.f32.gmra.mxu0 %v581
        %v928 = vpop.f32.mrf.mxu0
        %v929 = vadd.f32 %v442, %v928
        %v930 = vpop.f32.mrf.mxu0
        %931 = vmatprep.mubr.f32.mxu0 0.0
        %932 = vmatmul.mubr.f32.gmra.mxu0 %v584
        %v933 = vpop.f32.mrf.mxu0
        %v934 = vadd.f32 %v442, %v933
        %v935 = vpop.f32.mrf.mxu0
        %936 = vmatprep.mubr.f32.mxu0 0.0
        %937 = vmatmul.mubr.f32.gmra.mxu0 %v587
        %v938 = vpop.f32.mrf.mxu0
        %v939 = vadd.f32 %v442, %v938
        %v940 = vpop.f32.mrf.mxu0
        %941 = vmatprep.mubr.f32.mxu0 0.0
        %942 = vmatmul.mubr.f32.gmra.mxu0 %v590
        %v943 = vpop.f32.mrf.mxu0
        %v944 = vadd.f32 %v442, %v943
        %v945 = vpop.f32.mrf.mxu0
        %946 = vmatprep.mubr.f32.mxu0 0.0
        %947 = vmatmul.mubr.f32.gmra.mxu0 %v593
        %v948 = vpop.f32.mrf.mxu0
        %v949 = vadd.f32 %v442, %v948
        %v950 = vpop.f32.mrf.mxu0
        %951 = vmatprep.mubr.f32.mxu0 0.0
        %952 = vmatmul.mubr.f32.gmra.mxu0 %v596
        %v953 = vpop.f32.mrf.mxu0
        %v954 = vadd.f32 %v442, %v953
        %v955 = vpop.f32.mrf.mxu0
        %956 = vmatprep.mubr.f32.mxu0 0.0
        %957 = vmatmul.mubr.f32.gmra.mxu0 %v599
        %v958 = vpop.f32.mrf.mxu0
        %v959 = vadd.f32 %v442, %v958
        %v960 = vpop.f32.mrf.mxu0
        %961 = vmatprep.mubr.f32.mxu0 0.0
        %962 = vmatmul.mubr.f32.gmra.mxu0 %v602
        %v963 = vpop.f32.mrf.mxu0
        %v964 = vadd.f32 %v442, %v963
        %v965 = vpop.f32.mrf.mxu0
        %966 = vmatprep.mubr.f32.mxu0 0.0
        %967 = vmatmul.mubr.f32.gmra.mxu0 %v605
        %v968 = vpop.f32.mrf.mxu0
        %v969 = vadd.f32 %v442, %v968
        %v970 = vpop.f32.mrf.mxu0
        %971 = vmatprep.mubr.f32.mxu0 0.0
        %972 = vmatmul.mubr.f32.gmra.mxu0 %v608
        %v973 = vpop.f32.mrf.mxu0
        %v974 = vadd.f32 %v442, %v973
        %v975 = vpop.f32.mrf.mxu0
        %976 = vmatprep.mubr.f32.mxu0 0.0
        %977 = vmatmul.mubr.f32.gmra.mxu0 %v611
        %v978 = vpop.f32.mrf.mxu0
        %v979 = vadd.f32 %v442, %v978
        %v980 = vpop.f32.mrf.mxu0
        %981 = vmatprep.mubr.f32.mxu0 0.0
        %982 = vmatmul.mubr.f32.gmra.mxu0 %v614
        %v983 = vpop.f32.mrf.mxu0
        %v984 = vadd.f32 %v442, %v983
        %v985 = vpop.f32.mrf.mxu0
        %986 = vmatprep.mubr.f32.mxu0 0.0
        %987 = vmatmul.mubr.f32.gmra.mxu0 %v617
        %v988 = vpop.f32.mrf.mxu0
        %v989 = vadd.f32 %v442, %v988
        %v990 = vpop.f32.mrf.mxu0
        %991 = vmatprep.mubr.f32.mxu0 0.0
        %992 = vmatmul.mubr.f32.gmra.mxu0 %v620
        %v993 = vpop.f32.mrf.mxu0
        %v994 = vadd.f32 %v442, %v993
        %v995 = vpop.f32.mrf.mxu0
        %996 = vmatprep.mubr.f32.mxu0 0.0
        %997 = vmatmul.mubr.f32.gmra.mxu0 %v623
        %v998 = vpop.f32.mrf.mxu0
        %v999 = vadd.f32 %v442, %v998
        %v1000 = vpop.f32.mrf.mxu0
        %1001 = vmatprep.mubr.f32.mxu0 0.0
        %1002 = vmatmul.mubr.f32.gmra.mxu0 %v626
        %v1003 = vpop.f32.mrf.mxu0
        %v1004 = vadd.f32 %v442, %v1003
        %v1005 = vpop.f32.mrf.mxu0
        %1006 = vmatprep.mubr.f32.mxu0 0.0
        %1007 = vmatmul.mubr.f32.gmra.mxu0 %v629
        %v1008 = vpop.f32.mrf.mxu0
        %v1009 = vadd.f32 %v442, %v1008
        %v1010 = vpop.f32.mrf.mxu0
        %1011 = vmatprep.mubr.f32.mxu0 0.0
        %1012 = vmatmul.mubr.f32.gmra.mxu0 %v632
        %v1013 = vpop.f32.mrf.mxu0
        %v1014 = vadd.f32 %v442, %v1013
        %v1015 = vpop.f32.mrf.mxu0
        %1016 = vmatprep.mubr.f32.mxu0 0.0
        %1017 = vmatmul.mubr.f32.gmra.mxu0 %v635
        %v1018 = vpop.f32.mrf.mxu0
        %v1019 = vadd.f32 %v442, %v1018
        %v1020 = vpop.f32.mrf.mxu0
        %1021 = vdwg.mxu0
        %v1022 = vxor.u32 %v704, 2147483648
        %v1023 = vxor.u32 %v709, 2147483648
        %v1024 = vxor.u32 %v714, 2147483648
        %v1025 = vxor.u32 %v719, 2147483648
        %v1026 = vxor.u32 %v724, 2147483648
        %v1027 = vxor.u32 %v729, 2147483648
        %v1028 = vxor.u32 %v734, 2147483648
        %v1029 = vxor.u32 %v739, 2147483648
        %v1030 = vxor.u32 %v744, 2147483648
        %v1031 = vxor.u32 %v749, 2147483648
        %v1032 = vxor.u32 %v754, 2147483648
        %v1033 = vxor.u32 %v759, 2147483648
        %v1034 = vxor.u32 %v764, 2147483648
        %v1035 = vxor.u32 %v769, 2147483648
        %v1036 = vxor.u32 %v774, 2147483648
        %v1037 = vxor.u32 %v779, 2147483648
        %v1038 = vxor.u32 %v784, 2147483648
        %v1039 = vxor.u32 %v789, 2147483648
        %v1040 = vxor.u32 %v794, 2147483648
        %v1041 = vxor.u32 %v799, 2147483648
        %v1042 = vxor.u32 %v804, 2147483648
        %v1043 = vxor.u32 %v809, 2147483648
        %v1044 = vxor.u32 %v814, 2147483648
        %v1045 = vxor.u32 %v819, 2147483648
        %v1046 = vxor.u32 %v824, 2147483648
        %v1047 = vxor.u32 %v829, 2147483648
        %v1048 = vxor.u32 %v834, 2147483648
        %v1049 = vxor.u32 %v839, 2147483648
        %v1050 = vxor.u32 %v844, 2147483648
        %v1051 = vxor.u32 %v849, 2147483648
        %v1052 = vxor.u32 %v854, 2147483648
        %v1053 = vxor.u32 %v859, 2147483648
        %v1054 = vxor.u32 %v864, 2147483648
        %v1055 = vxor.u32 %v869, 2147483648
        %v1056 = vxor.u32 %v874, 2147483648
        %v1057 = vxor.u32 %v879, 2147483648
        %v1058 = vxor.u32 %v884, 2147483648
        %v1059 = vxor.u32 %v889, 2147483648
        %v1060 = vxor.u32 %v894, 2147483648
        %v1061 = vxor.u32 %v899, 2147483648
        %v1062 = vxor.u32 %v904, 2147483648
        %v1063 = vxor.u32 %v909, 2147483648
        %v1064 = vxor.u32 %v914, 2147483648
        %v1065 = vxor.u32 %v919, 2147483648
        %v1066 = vxor.u32 %v924, 2147483648
        %v1067 = vxor.u32 %v929, 2147483648
        %v1068 = vxor.u32 %v934, 2147483648
        %v1069 = vxor.u32 %v939, 2147483648
        %v1070 = vxor.u32 %v944, 2147483648
        %v1071 = vxor.u32 %v949, 2147483648
        %v1072 = vxor.u32 %v954, 2147483648
        %v1073 = vxor.u32 %v959, 2147483648
        %v1074 = vxor.u32 %v964, 2147483648
        %v1075 = vxor.u32 %v969, 2147483648
        %v1076 = vxor.u32 %v974, 2147483648
        %v1077 = vxor.u32 %v979, 2147483648
        %v1078 = vxor.u32 %v984, 2147483648
        %v1079 = vxor.u32 %v989, 2147483648
        %v1080 = vxor.u32 %v994, 2147483648
        %v1081 = vxor.u32 %v999, 2147483648
        %v1082 = vxor.u32 %v1004, 2147483648
        %v1083 = vxor.u32 %v1009, 2147483648
        %v1084 = vxor.u32 %v1014, 2147483648
        %v1085 = vxor.u32 %v1019, 2147483648
        %v1086 = vmul.f32 %v1022, 1.442695
        %v1087 = vpow.pop %v1086
        %v1088 = vmul.f32 %v1023, 1.442695
        %v1089 = vpow.pop %v1088
        %v1090 = vmul.f32 %v1024, 1.442695
        %v1091 = vpow.pop %v1090
        %v1092 = vmul.f32 %v1025, 1.442695
        %v1093 = vpow.pop %v1092
        %v1094 = vmul.f32 %v1026, 1.442695
        %v1095 = vpow.pop %v1094
        %v1096 = vmul.f32 %v1027, 1.442695
        %v1097 = vpow.pop %v1096
        %v1098 = vmul.f32 %v1028, 1.442695
        %v1099 = vpow.pop %v1098
        %v1100 = vmul.f32 %v1029, 1.442695
        %v1101 = vpow.pop %v1100
        %v1102 = vmul.f32 %v1030, 1.442695
        %v1103 = vpow.pop %v1102
        %v1104 = vmul.f32 %v1031, 1.442695
        %v1105 = vpow.pop %v1104
        %v1106 = vmul.f32 %v1032, 1.442695
        %v1107 = vpow.pop %v1106
        %v1108 = vmul.f32 %v1033, 1.442695
        %v1109 = vpow.pop %v1108
        %v1110 = vmul.f32 %v1034, 1.442695
        %v1111 = vpow.pop %v1110
        %v1112 = vmul.f32 %v1035, 1.442695
        %v1113 = vpow.pop %v1112
        %v1114 = vmul.f32 %v1036, 1.442695
        %v1115 = vpow.pop %v1114
        %v1116 = vmul.f32 %v1037, 1.442695
        %v1117 = vpow.pop %v1116
        %v1118 = vmul.f32 %v1038, 1.442695
        %v1119 = vpow.pop %v1118
        %v1120 = vmul.f32 %v1039, 1.442695
        %v1121 = vpow.pop %v1120
        %v1122 = vmul.f32 %v1040, 1.442695
        %v1123 = vpow.pop %v1122
        %v1124 = vmul.f32 %v1041, 1.442695
        %v1125 = vpow.pop %v1124
        %v1126 = vmul.f32 %v1042, 1.442695
        %v1127 = vpow.pop %v1126
        %v1128 = vmul.f32 %v1043, 1.442695
        %v1129 = vpow.pop %v1128
        %v1130 = vmul.f32 %v1044, 1.442695
        %v1131 = vpow.pop %v1130
        %v1132 = vmul.f32 %v1045, 1.442695
        %v1133 = vpow.pop %v1132
        %v1134 = vmul.f32 %v1046, 1.442695
        %v1135 = vpow.pop %v1134
        %v1136 = vmul.f32 %v1047, 1.442695
        %v1137 = vpow.pop %v1136
        %v1138 = vmul.f32 %v1048, 1.442695
        %v1139 = vpow.pop %v1138
        %v1140 = vmul.f32 %v1049, 1.442695
        %v1141 = vpow.pop %v1140
        %v1142 = vmul.f32 %v1050, 1.442695
        %v1143 = vpow.pop %v1142
        %v1144 = vmul.f32 %v1051, 1.442695
        %v1145 = vpow.pop %v1144
        %v1146 = vmul.f32 %v1052, 1.442695
        %v1147 = vpow.pop %v1146
        %v1148 = vmul.f32 %v1053, 1.442695
        %v1149 = vpow.pop %v1148
        %v1150 = vmul.f32 %v1054, 1.442695
        %v1151 = vpow.pop %v1150
        %v1152 = vmul.f32 %v1055, 1.442695
        %v1153 = vpow.pop %v1152
        %v1154 = vmul.f32 %v1056, 1.442695
        %v1155 = vpow.pop %v1154
        %v1156 = vmul.f32 %v1057, 1.442695
        %v1157 = vpow.pop %v1156
        %v1158 = vmul.f32 %v1058, 1.442695
        %v1159 = vpow.pop %v1158
        %v1160 = vmul.f32 %v1059, 1.442695
        %v1161 = vpow.pop %v1160
        %v1162 = vmul.f32 %v1060, 1.442695
        %v1163 = vpow.pop %v1162
        %v1164 = vmul.f32 %v1061, 1.442695
        %v1165 = vpow.pop %v1164
        %v1166 = vmul.f32 %v1062, 1.442695
        %v1167 = vpow.pop %v1166
        %v1168 = vmul.f32 %v1063, 1.442695
        %v1169 = vpow.pop %v1168
        %v1170 = vmul.f32 %v1064, 1.442695
        %v1171 = vpow.pop %v1170
        %v1172 = vmul.f32 %v1065, 1.442695
        %v1173 = vpow.pop %v1172
        %v1174 = vmul.f32 %v1066, 1.442695
        %v1175 = vpow.pop %v1174
        %v1176 = vmul.f32 %v1067, 1.442695
        %v1177 = vpow.pop %v1176
        %v1178 = vmul.f32 %v1068, 1.442695
        %v1179 = vpow.pop %v1178
        %v1180 = vmul.f32 %v1069, 1.442695
        %v1181 = vpow.pop %v1180
        %v1182 = vmul.f32 %v1070, 1.442695
        %v1183 = vpow.pop %v1182
        %v1184 = vmul.f32 %v1071, 1.442695
        %v1185 = vpow.pop %v1184
        %v1186 = vmul.f32 %v1072, 1.442695
        %v1187 = vpow.pop %v1186
        %v1188 = vmul.f32 %v1073, 1.442695
        %v1189 = vpow.pop %v1188
        %v1190 = vmul.f32 %v1074, 1.442695
        %v1191 = vpow.pop %v1190
        %v1192 = vmul.f32 %v1075, 1.442695
        %v1193 = vpow.pop %v1192
        %v1194 = vmul.f32 %v1076, 1.442695
        %v1195 = vpow.pop %v1194
        %v1196 = vmul.f32 %v1077, 1.442695
        %v1197 = vpow.pop %v1196
        %v1198 = vmul.f32 %v1078, 1.442695
        %v1199 = vpow.pop %v1198
        %v1200 = vmul.f32 %v1079, 1.442695
        %v1201 = vpow.pop %v1200
        %v1202 = vmul.f32 %v1080, 1.442695
        %v1203 = vpow.pop %v1202
        %v1204 = vmul.f32 %v1081, 1.442695
        %v1205 = vpow.pop %v1204
        %v1206 = vmul.f32 %v1082, 1.442695
        %v1207 = vpow.pop %v1206
        %v1208 = vmul.f32 %v1083, 1.442695
        %v1209 = vpow.pop %v1208
        %v1210 = vmul.f32 %v1084, 1.442695
        %v1211 = vpow.pop %v1210
        %v1212 = vmul.f32 %v1085, 1.442695
        %v1213 = vpow.pop %v1212
        %v1214 = vadd.f32 %v1087, 1.0
        %v1215 = vadd.f32 %v1089, 1.0
        %v1216 = vadd.f32 %v1091, 1.0
        %v1217 = vadd.f32 %v1093, 1.0
        %v1218 = vadd.f32 %v1095, 1.0
        %v1219 = vadd.f32 %v1097, 1.0
        %v1220 = vadd.f32 %v1099, 1.0
        %v1221 = vadd.f32 %v1101, 1.0
        %v1222 = vadd.f32 %v1103, 1.0
        %v1223 = vadd.f32 %v1105, 1.0
        %v1224 = vadd.f32 %v1107, 1.0
        %v1225 = vadd.f32 %v1109, 1.0
        %v1226 = vadd.f32 %v1111, 1.0
        %v1227 = vadd.f32 %v1113, 1.0
        %v1228 = vadd.f32 %v1115, 1.0
        %v1229 = vadd.f32 %v1117, 1.0
        %v1230 = vadd.f32 %v1119, 1.0
        %v1231 = vadd.f32 %v1121, 1.0
        %v1232 = vadd.f32 %v1123, 1.0
        %v1233 = vadd.f32 %v1125, 1.0
        %v1234 = vadd.f32 %v1127, 1.0
        %v1235 = vadd.f32 %v1129, 1.0
        %v1236 = vadd.f32 %v1131, 1.0
        %v1237 = vadd.f32 %v1133, 1.0
        %v1238 = vadd.f32 %v1135, 1.0
        %v1239 = vadd.f32 %v1137, 1.0
        %v1240 = vadd.f32 %v1139, 1.0
        %v1241 = vadd.f32 %v1141, 1.0
        %v1242 = vadd.f32 %v1143, 1.0
        %v1243 = vadd.f32 %v1145, 1.0
        %v1244 = vadd.f32 %v1147, 1.0
        %v1245 = vadd.f32 %v1149, 1.0
        %v1246 = vadd.f32 %v1151, 1.0
        %v1247 = vadd.f32 %v1153, 1.0
        %v1248 = vadd.f32 %v1155, 1.0
        %v1249 = vadd.f32 %v1157, 1.0
        %v1250 = vadd.f32 %v1159, 1.0
        %v1251 = vadd.f32 %v1161, 1.0
        %v1252 = vadd.f32 %v1163, 1.0
        %v1253 = vadd.f32 %v1165, 1.0
        %v1254 = vadd.f32 %v1167, 1.0
        %v1255 = vadd.f32 %v1169, 1.0
        %v1256 = vadd.f32 %v1171, 1.0
        %v1257 = vadd.f32 %v1173, 1.0
        %v1258 = vadd.f32 %v1175, 1.0
        %v1259 = vadd.f32 %v1177, 1.0
        %v1260 = vadd.f32 %v1179, 1.0
        %v1261 = vadd.f32 %v1181, 1.0
        %v1262 = vadd.f32 %v1183, 1.0
        %v1263 = vadd.f32 %v1185, 1.0
        %v1264 = vadd.f32 %v1187, 1.0
        %v1265 = vadd.f32 %v1189, 1.0
        %v1266 = vadd.f32 %v1191, 1.0
        %v1267 = vadd.f32 %v1193, 1.0
        %v1268 = vadd.f32 %v1195, 1.0
        %v1269 = vadd.f32 %v1197, 1.0
        %v1270 = vadd.f32 %v1199, 1.0
        %v1271 = vadd.f32 %v1201, 1.0
        %v1272 = vadd.f32 %v1203, 1.0
        %v1273 = vadd.f32 %v1205, 1.0
        %v1274 = vadd.f32 %v1207, 1.0
        %v1275 = vadd.f32 %v1209, 1.0
        %v1276 = vadd.f32 %v1211, 1.0
        %v1277 = vadd.f32 %v1213, 1.0
        %v1278 = vrcp.pop %v1214
        %v1279 = vmul.f32 1.0, %v1278
        %v1280 = vrcp.pop %v1215
        %v1281 = vmul.f32 1.0, %v1280
        %v1282 = vrcp.pop %v1216
        %v1283 = vmul.f32 1.0, %v1282
        %v1284 = vrcp.pop %v1217
        %v1285 = vmul.f32 1.0, %v1284
        %v1286 = vrcp.pop %v1218
        %v1287 = vmul.f32 1.0, %v1286
        %v1288 = vrcp.pop %v1219
        %v1289 = vmul.f32 1.0, %v1288
        %v1290 = vrcp.pop %v1220
        %v1291 = vmul.f32 1.0, %v1290
        %v1292 = vrcp.pop %v1221
        %v1293 = vmul.f32 1.0, %v1292
        %v1294 = vrcp.pop %v1222
        %v1295 = vmul.f32 1.0, %v1294
        %v1296 = vrcp.pop %v1223
        %v1297 = vmul.f32 1.0, %v1296
        %v1298 = vrcp.pop %v1224
        %v1299 = vmul.f32 1.0, %v1298
        %v1300 = vrcp.pop %v1225
        %v1301 = vmul.f32 1.0, %v1300
        %v1302 = vrcp.pop %v1226
        %v1303 = vmul.f32 1.0, %v1302
        %v1304 = vrcp.pop %v1227
        %v1305 = vmul.f32 1.0, %v1304
        %v1306 = vrcp.pop %v1228
        %v1307 = vmul.f32 1.0, %v1306
        %v1308 = vrcp.pop %v1229
        %v1309 = vmul.f32 1.0, %v1308
        %v1310 = vrcp.pop %v1230
        %v1311 = vmul.f32 1.0, %v1310
        %v1312 = vrcp.pop %v1231
        %v1313 = vmul.f32 1.0, %v1312
        %v1314 = vrcp.pop %v1232
        %v1315 = vmul.f32 1.0, %v1314
        %v1316 = vrcp.pop %v1233
        %v1317 = vmul.f32 1.0, %v1316
        %v1318 = vrcp.pop %v1234
        %v1319 = vmul.f32 1.0, %v1318
        %v1320 = vrcp.pop %v1235
        %v1321 = vmul.f32 1.0, %v1320
        %v1322 = vrcp.pop %v1236
        %v1323 = vmul.f32 1.0, %v1322
        %v1324 = vrcp.pop %v1237
        %v1325 = vmul.f32 1.0, %v1324
        %v1326 = vrcp.pop %v1238
        %v1327 = vmul.f32 1.0, %v1326
        %v1328 = vrcp.pop %v1239
        %v1329 = vmul.f32 1.0, %v1328
        %v1330 = vrcp.pop %v1240
        %v1331 = vmul.f32 1.0, %v1330
        %v1332 = vrcp.pop %v1241
        %v1333 = vmul.f32 1.0, %v1332
        %v1334 = vrcp.pop %v1242
        %v1335 = vmul.f32 1.0, %v1334
        %v1336 = vrcp.pop %v1243
        %v1337 = vmul.f32 1.0, %v1336
        %v1338 = vrcp.pop %v1244
        %v1339 = vmul.f32 1.0, %v1338
        %v1340 = vrcp.pop %v1245
        %v1341 = vmul.f32 1.0, %v1340
        %v1342 = vrcp.pop %v1246
        %v1343 = vmul.f32 1.0, %v1342
        %v1344 = vrcp.pop %v1247
        %v1345 = vmul.f32 1.0, %v1344
        %v1346 = vrcp.pop %v1248
        %v1347 = vmul.f32 1.0, %v1346
        %v1348 = vrcp.pop %v1249
        %v1349 = vmul.f32 1.0, %v1348
        %v1350 = vrcp.pop %v1250
        %v1351 = vmul.f32 1.0, %v1350
        %v1352 = vrcp.pop %v1251
        %v1353 = vmul.f32 1.0, %v1352
        %v1354 = vrcp.pop %v1252
        %v1355 = vmul.f32 1.0, %v1354
        %v1356 = vrcp.pop %v1253
        %v1357 = vmul.f32 1.0, %v1356
        %v1358 = vrcp.pop %v1254
        %v1359 = vmul.f32 1.0, %v1358
        %v1360 = vrcp.pop %v1255
        %v1361 = vmul.f32 1.0, %v1360
        %v1362 = vrcp.pop %v1256
        %v1363 = vmul.f32 1.0, %v1362
        %v1364 = vrcp.pop %v1257
        %v1365 = vmul.f32 1.0, %v1364
        %v1366 = vrcp.pop %v1258
        %v1367 = vmul.f32 1.0, %v1366
        %v1368 = vrcp.pop %v1259
        %v1369 = vmul.f32 1.0, %v1368
        %v1370 = vrcp.pop %v1260
        %v1371 = vmul.f32 1.0, %v1370
        %v1372 = vrcp.pop %v1261
        %v1373 = vmul.f32 1.0, %v1372
        %v1374 = vrcp.pop %v1262
        %v1375 = vmul.f32 1.0, %v1374
        %v1376 = vrcp.pop %v1263
        %v1377 = vmul.f32 1.0, %v1376
        %v1378 = vrcp.pop %v1264
        %v1379 = vmul.f32 1.0, %v1378
        %v1380 = vrcp.pop %v1265
        %v1381 = vmul.f32 1.0, %v1380
        %v1382 = vrcp.pop %v1266
        %v1383 = vmul.f32 1.0, %v1382
        %v1384 = vrcp.pop %v1267
        %v1385 = vmul.f32 1.0, %v1384
        %v1386 = vrcp.pop %v1268
        %v1387 = vmul.f32 1.0, %v1386
        %v1388 = vrcp.pop %v1269
        %v1389 = vmul.f32 1.0, %v1388
        %v1390 = vrcp.pop %v1270
        %v1391 = vmul.f32 1.0, %v1390
        %v1392 = vrcp.pop %v1271
        %v1393 = vmul.f32 1.0, %v1392
        %v1394 = vrcp.pop %v1272
        %v1395 = vmul.f32 1.0, %v1394
        %v1396 = vrcp.pop %v1273
        %v1397 = vmul.f32 1.0, %v1396
        %v1398 = vrcp.pop %v1274
        %v1399 = vmul.f32 1.0, %v1398
        %v1400 = vrcp.pop %v1275
        %v1401 = vmul.f32 1.0, %v1400
        %v1402 = vrcp.pop %v1276
        %v1403 = vmul.f32 1.0, %v1402
        %v1404 = vrcp.pop %v1277
        %v1405 = vmul.f32 1.0, %v1404
        %s1406 = smul.u32 %s294, 32
        %s1407 = scalar_lea.vmem %s5, %s1406
        %v1408 = vld [vmem:[%s1407] sm:$0xff]
        %v1409 = vld [vmem:[%s1407 + $0x8] sm:$0xff]
        %v1410 = vld [vmem:[%s1407 + $0x10] sm:$0xff]
        %v1411 = vld [vmem:[%s1407 + $0x18] sm:$0xff]
        %s1412 = scalar_lea.vmem %s6, %s294
        %v1413 = vld [vmem:[%s1412] sm:$0x1]
        %v1415 = vlaneseq
        %v1416 = vshrl.u32 %v1415, 7
        %v1417 = vsub.s32 0, %v1416
        %v1418 = vrot.slane %v1413, %v1417
        %vm1420 = vcmask 261120
        %v1422 = vsel %vm1420, %v1279, 0
        %v1425 = vsel %vm1420, %v1281, 0
        %v1428 = vsel %vm1420, %v1283, 0
        %v1431 = vsel %vm1420, %v1285, 0
        %v1434 = vsel %vm1420, %v1287, 0
        %v1437 = vsel %vm1420, %v1289, 0
        %v1440 = vsel %vm1420, %v1291, 0
        %v1443 = vsel %vm1420, %v1293, 0
        %v1446 = vsel %vm1420, %v1295, 0
        %v1449 = vsel %vm1420, %v1297, 0
        %v1452 = vsel %vm1420, %v1299, 0
        %v1455 = vsel %vm1420, %v1301, 0
        %v1458 = vsel %vm1420, %v1303, 0
        %v1461 = vsel %vm1420, %v1305, 0
        %v1464 = vsel %vm1420, %v1307, 0
        %v1467 = vsel %vm1420, %v1309, 0
        %v1470 = vsel %vm1420, %v1311, 0
        %v1473 = vsel %vm1420, %v1313, 0
        %v1476 = vsel %vm1420, %v1315, 0
        %v1479 = vsel %vm1420, %v1317, 0
        %v1482 = vsel %vm1420, %v1319, 0
        %v1485 = vsel %vm1420, %v1321, 0
        %v1488 = vsel %vm1420, %v1323, 0
        %v1491 = vsel %vm1420, %v1325, 0
        %v1494 = vsel %vm1420, %v1327, 0
        %v1497 = vsel %vm1420, %v1329, 0
        %v1500 = vsel %vm1420, %v1331, 0
        %v1503 = vsel %vm1420, %v1333, 0
        %v1506 = vsel %vm1420, %v1335, 0
        %v1509 = vsel %vm1420, %v1337, 0
        %v1512 = vsel %vm1420, %v1339, 0
        %v1515 = vsel %vm1420, %v1341, 0
        %v1518 = vsel %vm1420, %v1343, 0
        %v1521 = vsel %vm1420, %v1345, 0
        %v1524 = vsel %vm1420, %v1347, 0
        %v1527 = vsel %vm1420, %v1349, 0
        %v1530 = vsel %vm1420, %v1351, 0
        %v1533 = vsel %vm1420, %v1353, 0
        %v1536 = vsel %vm1420, %v1355, 0
        %v1539 = vsel %vm1420, %v1357, 0
        %v1542 = vsel %vm1420, %v1359, 0
        %v1545 = vsel %vm1420, %v1361, 0
        %v1548 = vsel %vm1420, %v1363, 0
        %v1551 = vsel %vm1420, %v1365, 0
        %v1554 = vsel %vm1420, %v1367, 0
        %v1557 = vsel %vm1420, %v1369, 0
        %v1560 = vsel %vm1420, %v1371, 0
        %v1563 = vsel %vm1420, %v1373, 0
        %v1566 = vsel %vm1420, %v1375, 0
        %v1569 = vsel %vm1420, %v1377, 0
        %v1572 = vsel %vm1420, %v1379, 0
        %v1575 = vsel %vm1420, %v1381, 0
        %v1578 = vsel %vm1420, %v1383, 0
        %v1581 = vsel %vm1420, %v1385, 0
        %v1584 = vsel %vm1420, %v1387, 0
        %v1587 = vsel %vm1420, %v1389, 0
        %v1590 = vsel %vm1420, %v1391, 0
        %v1593 = vsel %vm1420, %v1393, 0
        %v1596 = vsel %vm1420, %v1395, 0
        %v1599 = vsel %vm1420, %v1397, 0
        %v1602 = vsel %vm1420, %v1399, 0
        %v1605 = vsel %vm1420, %v1401, 0
        %v1608 = vsel %vm1420, %v1403, 0
        %v1611 = vsel %vm1420, %v1405, 0
        %1613 = vmatprep.subr.mxu0 0.0
        %1614 = vmatpush1.msra.mxu0 0.0
        %1615 = vmatprep.subr.mxu0 0.0
        %1616 = vmatpush1.msra.mxu0 0.0
        %1617 = vmatprep.subr.mxu0 0.0
        %1618 = vmatpush1.msra.mxu0 0.0
        %1619 = vmatprep.subr.mxu0 0.0
        %1620 = vmatpush1.msra.mxu0 0.0
        %1621 = vmatprep.subr.mxu0 0.0
        %1622 = vmatpush1.msra.mxu0 0.0
        %1623 = vmatprep.subr.mxu0 0.0
        %1624 = vmatpush1.msra.mxu0 0.0
        %1625 = vmatprep.subr.mxu0 0.0
        %1626 = vmatpush1.msra.mxu0 0.0
        %1627 = vmatprep.subr.mxu0 0.0
        %1628 = vmatpush1.msra.mxu0 0.0
        %1629 = vmatprep.subr.mxu0 0.0
        %1630 = vmatpush1.msra.mxu0 0.0
        %1631 = vmatprep.subr.mxu0 0.0
        %1632 = vmatpush1.msra.mxu0 0.0
        %1633 = vmatprep.subr.mxu0 0.0
        %1634 = vmatpush1.msra.mxu0 0.0
        %1635 = vmatprep.subr.mxu0 0.0
        %1636 = vmatpush1.msra.mxu0 0.0
        %1637 = vmatprep.subr.mxu0 0.0
        %1638 = vmatpush1.msra.mxu0 %v1411
        %1639 = vmatprep.subr.mxu0 0.0
        %1640 = vmatpush1.msra.mxu0 %v1410
        %1641 = vmatprep.subr.mxu0 0.0
        %1642 = vmatpush1.msra.mxu0 %v1409
        %1643 = vmatprep.subr.mxu0 0.0
        %1644 = vmatpush1.msra.mxu0 %v1408
        %1645 = vmatprep.subr.mxu0 0.0
        %1646 = vmatpush2.msra.mxu0 0.0
        %1647 = vmatprep.subr.mxu0 0.0
        %1648 = vmatpush2.msra.mxu0 0.0
        %1649 = vmatprep.subr.mxu0 0.0
        %1650 = vmatpush2.msra.mxu0 0.0
        %1651 = vmatprep.subr.mxu0 0.0
        %1652 = vmatpush2.msra.mxu0 0.0
        %1653 = vmatprep.subr.mxu0 0.0
        %1654 = vmatpush2.msra.mxu0 0.0
        %1655 = vmatprep.subr.mxu0 0.0
        %1656 = vmatpush2.msra.mxu0 0.0
        %1657 = vmatprep.subr.mxu0 0.0
        %1658 = vmatpush2.msra.mxu0 0.0
        %1659 = vmatprep.subr.mxu0 0.0
        %1660 = vmatpush2.msra.mxu0 0.0
        %1661 = vmatprep.subr.mxu0 0.0
        %1662 = vmatpush2.msra.mxu0 0.0
        %1663 = vmatprep.subr.mxu0 0.0
        %1664 = vmatpush2.msra.mxu0 0.0
        %1665 = vmatprep.subr.mxu0 0.0
        %1666 = vmatpush2.msra.mxu0 0.0
        %1667 = vmatprep.subr.mxu0 0.0
        %1668 = vmatpush2.msra.mxu0 0.0
        %1669 = vmatprep.subr.mxu0 0.0
        %1670 = vmatpush2.msra.mxu0 0.0
        %1671 = vmatprep.subr.mxu0 0.0
        %1672 = vmatpush2.msra.mxu0 0.0
        %1673 = vmatprep.subr.mxu0 0.0
        %1674 = vmatpush2.msra.mxu0 0.0
        %1675 = vmatprep.subr.mxu0 0.0
        %1676 = vmatpush2.msra.mxu0 0.0
        %1677 = vmatprep.mubr.f32.mxu0 0.0
        %1678 = vmatmul.mubr.f32.gmra.mxu0 %v1422
        %v1679 = vpop.f32.mrf.mxu0
        %v1680 = vadd.f32 %v1418, %v1679
        %v1681 = vpop.f32.mrf.mxu0
        %1682 = vmatprep.mubr.f32.mxu0 0.0
        %1683 = vmatmul.mubr.f32.gmra.mxu0 %v1425
        %v1684 = vpop.f32.mrf.mxu0
        %v1685 = vadd.f32 %v1418, %v1684
        %v1686 = vpop.f32.mrf.mxu0
        %1687 = vmatprep.mubr.f32.mxu0 0.0
        %1688 = vmatmul.mubr.f32.gmra.mxu0 %v1428
        %v1689 = vpop.f32.mrf.mxu0
        %v1690 = vadd.f32 %v1418, %v1689
        %v1691 = vpop.f32.mrf.mxu0
        %1692 = vmatprep.mubr.f32.mxu0 0.0
        %1693 = vmatmul.mubr.f32.gmra.mxu0 %v1431
        %v1694 = vpop.f32.mrf.mxu0
        %v1695 = vadd.f32 %v1418, %v1694
        %v1696 = vpop.f32.mrf.mxu0
        %1697 = vmatprep.mubr.f32.mxu0 0.0
        %1698 = vmatmul.mubr.f32.gmra.mxu0 %v1434
        %v1699 = vpop.f32.mrf.mxu0
        %v1700 = vadd.f32 %v1418, %v1699
        %v1701 = vpop.f32.mrf.mxu0
        %1702 = vmatprep.mubr.f32.mxu0 0.0
        %1703 = vmatmul.mubr.f32.gmra.mxu0 %v1437
        %v1704 = vpop.f32.mrf.mxu0
        %v1705 = vadd.f32 %v1418, %v1704
        %v1706 = vpop.f32.mrf.mxu0
        %1707 = vmatprep.mubr.f32.mxu0 0.0
        %1708 = vmatmul.mubr.f32.gmra.mxu0 %v1440
        %v1709 = vpop.f32.mrf.mxu0
        %v1710 = vadd.f32 %v1418, %v1709
        %v1711 = vpop.f32.mrf.mxu0
        %1712 = vmatprep.mubr.f32.mxu0 0.0
        %1713 = vmatmul.mubr.f32.gmra.mxu0 %v1443
        %v1714 = vpop.f32.mrf.mxu0
        %v1715 = vadd.f32 %v1418, %v1714
        %v1716 = vpop.f32.mrf.mxu0
        %1717 = vmatprep.mubr.f32.mxu0 0.0
        %1718 = vmatmul.mubr.f32.gmra.mxu0 %v1446
        %v1719 = vpop.f32.mrf.mxu0
        %v1720 = vadd.f32 %v1418, %v1719
        %v1721 = vpop.f32.mrf.mxu0
        %1722 = vmatprep.mubr.f32.mxu0 0.0
        %1723 = vmatmul.mubr.f32.gmra.mxu0 %v1449
        %v1724 = vpop.f32.mrf.mxu0
        %v1725 = vadd.f32 %v1418, %v1724
        %v1726 = vpop.f32.mrf.mxu0
        %1727 = vmatprep.mubr.f32.mxu0 0.0
        %1728 = vmatmul.mubr.f32.gmra.mxu0 %v1452
        %v1729 = vpop.f32.mrf.mxu0
        %v1730 = vadd.f32 %v1418, %v1729
        %v1731 = vpop.f32.mrf.mxu0
        %1732 = vmatprep.mubr.f32.mxu0 0.0
        %1733 = vmatmul.mubr.f32.gmra.mxu0 %v1455
        %v1734 = vpop.f32.mrf.mxu0
        %v1735 = vadd.f32 %v1418, %v1734
        %v1736 = vpop.f32.mrf.mxu0
        %1737 = vmatprep.mubr.f32.mxu0 0.0
        %1738 = vmatmul.mubr.f32.gmra.mxu0 %v1458
        %v1739 = vpop.f32.mrf.mxu0
        %v1740 = vadd.f32 %v1418, %v1739
        %v1741 = vpop.f32.mrf.mxu0
        %1742 = vmatprep.mubr.f32.mxu0 0.0
        %1743 = vmatmul.mubr.f32.gmra.mxu0 %v1461
        %v1744 = vpop.f32.mrf.mxu0
        %v1745 = vadd.f32 %v1418, %v1744
        %v1746 = vpop.f32.mrf.mxu0
        %1747 = vmatprep.mubr.f32.mxu0 0.0
        %1748 = vmatmul.mubr.f32.gmra.mxu0 %v1464
        %v1749 = vpop.f32.mrf.mxu0
        %v1750 = vadd.f32 %v1418, %v1749
        %v1751 = vpop.f32.mrf.mxu0
        %1752 = vmatprep.mubr.f32.mxu0 0.0
        %1753 = vmatmul.mubr.f32.gmra.mxu0 %v1467
        %v1754 = vpop.f32.mrf.mxu0
        %v1755 = vadd.f32 %v1418, %v1754
        %v1756 = vpop.f32.mrf.mxu0
        %1757 = vmatprep.mubr.f32.mxu0 0.0
        %1758 = vmatmul.mubr.f32.gmra.mxu0 %v1470
        %v1759 = vpop.f32.mrf.mxu0
        %v1760 = vadd.f32 %v1418, %v1759
        %v1761 = vpop.f32.mrf.mxu0
        %1762 = vmatprep.mubr.f32.mxu0 0.0
        %1763 = vmatmul.mubr.f32.gmra.mxu0 %v1473
        %v1764 = vpop.f32.mrf.mxu0
        %v1765 = vadd.f32 %v1418, %v1764
        %v1766 = vpop.f32.mrf.mxu0
        %1767 = vmatprep.mubr.f32.mxu0 0.0
        %1768 = vmatmul.mubr.f32.gmra.mxu0 %v1476
        %v1769 = vpop.f32.mrf.mxu0
        %v1770 = vadd.f32 %v1418, %v1769
        %v1771 = vpop.f32.mrf.mxu0
        %1772 = vmatprep.mubr.f32.mxu0 0.0
        %1773 = vmatmul.mubr.f32.gmra.mxu0 %v1479
        %v1774 = vpop.f32.mrf.mxu0
        %v1775 = vadd.f32 %v1418, %v1774
        %v1776 = vpop.f32.mrf.mxu0
        %1777 = vmatprep.mubr.f32.mxu0 0.0
        %1778 = vmatmul.mubr.f32.gmra.mxu0 %v1482
        %v1779 = vpop.f32.mrf.mxu0
        %v1780 = vadd.f32 %v1418, %v1779
        %v1781 = vpop.f32.mrf.mxu0
        %1782 = vmatprep.mubr.f32.mxu0 0.0
        %1783 = vmatmul.mubr.f32.gmra.mxu0 %v1485
        %v1784 = vpop.f32.mrf.mxu0
        %v1785 = vadd.f32 %v1418, %v1784
        %v1786 = vpop.f32.mrf.mxu0
        %1787 = vmatprep.mubr.f32.mxu0 0.0
        %1788 = vmatmul.mubr.f32.gmra.mxu0 %v1488
        %v1789 = vpop.f32.mrf.mxu0
        %v1790 = vadd.f32 %v1418, %v1789
        %v1791 = vpop.f32.mrf.mxu0
        %1792 = vmatprep.mubr.f32.mxu0 0.0
        %1793 = vmatmul.mubr.f32.gmra.mxu0 %v1491
        %v1794 = vpop.f32.mrf.mxu0
        %v1795 = vadd.f32 %v1418, %v1794
        %v1796 = vpop.f32.mrf.mxu0
        %1797 = vmatprep.mubr.f32.mxu0 0.0
        %1798 = vmatmul.mubr.f32.gmra.mxu0 %v1494
        %v1799 = vpop.f32.mrf.mxu0
        %v1800 = vadd.f32 %v1418, %v1799
        %v1801 = vpop.f32.mrf.mxu0
        %1802 = vmatprep.mubr.f32.mxu0 0.0
        %1803 = vmatmul.mubr.f32.gmra.mxu0 %v1497
        %v1804 = vpop.f32.mrf.mxu0
        %v1805 = vadd.f32 %v1418, %v1804
        %v1806 = vpop.f32.mrf.mxu0
        %1807 = vmatprep.mubr.f32.mxu0 0.0
        %1808 = vmatmul.mubr.f32.gmra.mxu0 %v1500
        %v1809 = vpop.f32.mrf.mxu0
        %v1810 = vadd.f32 %v1418, %v1809
        %v1811 = vpop.f32.mrf.mxu0
        %1812 = vmatprep.mubr.f32.mxu0 0.0
        %1813 = vmatmul.mubr.f32.gmra.mxu0 %v1503
        %v1814 = vpop.f32.mrf.mxu0
        %v1815 = vadd.f32 %v1418, %v1814
        %v1816 = vpop.f32.mrf.mxu0
        %1817 = vmatprep.mubr.f32.mxu0 0.0
        %1818 = vmatmul.mubr.f32.gmra.mxu0 %v1506
        %v1819 = vpop.f32.mrf.mxu0
        %v1820 = vadd.f32 %v1418, %v1819
        %v1821 = vpop.f32.mrf.mxu0
        %1822 = vmatprep.mubr.f32.mxu0 0.0
        %1823 = vmatmul.mubr.f32.gmra.mxu0 %v1509
        %v1824 = vpop.f32.mrf.mxu0
        %v1825 = vadd.f32 %v1418, %v1824
        %v1826 = vpop.f32.mrf.mxu0
        %1827 = vmatprep.mubr.f32.mxu0 0.0
        %1828 = vmatmul.mubr.f32.gmra.mxu0 %v1512
        %v1829 = vpop.f32.mrf.mxu0
        %v1830 = vadd.f32 %v1418, %v1829
        %v1831 = vpop.f32.mrf.mxu0
        %1832 = vmatprep.mubr.f32.mxu0 0.0
        %1833 = vmatmul.mubr.f32.gmra.mxu0 %v1515
        %v1834 = vpop.f32.mrf.mxu0
        %v1835 = vadd.f32 %v1418, %v1834
        %v1836 = vpop.f32.mrf.mxu0
        %1837 = vmatprep.mubr.f32.mxu0 0.0
        %1838 = vmatmul.mubr.f32.gmra.mxu0 %v1518
        %v1839 = vpop.f32.mrf.mxu0
        %v1840 = vadd.f32 %v1418, %v1839
        %v1841 = vpop.f32.mrf.mxu0
        %1842 = vmatprep.mubr.f32.mxu0 0.0
        %1843 = vmatmul.mubr.f32.gmra.mxu0 %v1521
        %v1844 = vpop.f32.mrf.mxu0
        %v1845 = vadd.f32 %v1418, %v1844
        %v1846 = vpop.f32.mrf.mxu0
        %1847 = vmatprep.mubr.f32.mxu0 0.0
        %1848 = vmatmul.mubr.f32.gmra.mxu0 %v1524
        %v1849 = vpop.f32.mrf.mxu0
        %v1850 = vadd.f32 %v1418, %v1849
        %v1851 = vpop.f32.mrf.mxu0
        %1852 = vmatprep.mubr.f32.mxu0 0.0
        %1853 = vmatmul.mubr.f32.gmra.mxu0 %v1527
        %v1854 = vpop.f32.mrf.mxu0
        %v1855 = vadd.f32 %v1418, %v1854
        %v1856 = vpop.f32.mrf.mxu0
        %1857 = vmatprep.mubr.f32.mxu0 0.0
        %1858 = vmatmul.mubr.f32.gmra.mxu0 %v1530
        %v1859 = vpop.f32.mrf.mxu0
        %v1860 = vadd.f32 %v1418, %v1859
        %v1861 = vpop.f32.mrf.mxu0
        %1862 = vmatprep.mubr.f32.mxu0 0.0
        %1863 = vmatmul.mubr.f32.gmra.mxu0 %v1533
        %v1864 = vpop.f32.mrf.mxu0
        %v1865 = vadd.f32 %v1418, %v1864
        %v1866 = vpop.f32.mrf.mxu0
        %1867 = vmatprep.mubr.f32.mxu0 0.0
        %1868 = vmatmul.mubr.f32.gmra.mxu0 %v1536
        %v1869 = vpop.f32.mrf.mxu0
        %v1870 = vadd.f32 %v1418, %v1869
        %v1871 = vpop.f32.mrf.mxu0
        %1872 = vmatprep.mubr.f32.mxu0 0.0
        %1873 = vmatmul.mubr.f32.gmra.mxu0 %v1539
        %v1874 = vpop.f32.mrf.mxu0
        %v1875 = vadd.f32 %v1418, %v1874
        %v1876 = vpop.f32.mrf.mxu0
        %1877 = vmatprep.mubr.f32.mxu0 0.0
        %1878 = vmatmul.mubr.f32.gmra.mxu0 %v1542
        %v1879 = vpop.f32.mrf.mxu0
        %v1880 = vadd.f32 %v1418, %v1879
        %v1881 = vpop.f32.mrf.mxu0
        %1882 = vmatprep.mubr.f32.mxu0 0.0
        %1883 = vmatmul.mubr.f32.gmra.mxu0 %v1545
        %v1884 = vpop.f32.mrf.mxu0
        %v1885 = vadd.f32 %v1418, %v1884
        %v1886 = vpop.f32.mrf.mxu0
        %1887 = vmatprep.mubr.f32.mxu0 0.0
        %1888 = vmatmul.mubr.f32.gmra.mxu0 %v1548
        %v1889 = vpop.f32.mrf.mxu0
        %v1890 = vadd.f32 %v1418, %v1889
        %v1891 = vpop.f32.mrf.mxu0
        %1892 = vmatprep.mubr.f32.mxu0 0.0
        %1893 = vmatmul.mubr.f32.gmra.mxu0 %v1551
        %v1894 = vpop.f32.mrf.mxu0
        %v1895 = vadd.f32 %v1418, %v1894
        %v1896 = vpop.f32.mrf.mxu0
        %1897 = vmatprep.mubr.f32.mxu0 0.0
        %1898 = vmatmul.mubr.f32.gmra.mxu0 %v1554
        %v1899 = vpop.f32.mrf.mxu0
        %v1900 = vadd.f32 %v1418, %v1899
        %v1901 = vpop.f32.mrf.mxu0
        %1902 = vmatprep.mubr.f32.mxu0 0.0
        %1903 = vmatmul.mubr.f32.gmra.mxu0 %v1557
        %v1904 = vpop.f32.mrf.mxu0
        %v1905 = vadd.f32 %v1418, %v1904
        %v1906 = vpop.f32.mrf.mxu0
        %1907 = vmatprep.mubr.f32.mxu0 0.0
        %1908 = vmatmul.mubr.f32.gmra.mxu0 %v1560
        %v1909 = vpop.f32.mrf.mxu0
        %v1910 = vadd.f32 %v1418, %v1909
        %v1911 = vpop.f32.mrf.mxu0
        %1912 = vmatprep.mubr.f32.mxu0 0.0
        %1913 = vmatmul.mubr.f32.gmra.mxu0 %v1563
        %v1914 = vpop.f32.mrf.mxu0
        %v1915 = vadd.f32 %v1418, %v1914
        %v1916 = vpop.f32.mrf.mxu0
        %1917 = vmatprep.mubr.f32.mxu0 0.0
        %1918 = vmatmul.mubr.f32.gmra.mxu0 %v1566
        %v1919 = vpop.f32.mrf.mxu0
        %v1920 = vadd.f32 %v1418, %v1919
        %v1921 = vpop.f32.mrf.mxu0
        %1922 = vmatprep.mubr.f32.mxu0 0.0
        %1923 = vmatmul.mubr.f32.gmra.mxu0 %v1569
        %v1924 = vpop.f32.mrf.mxu0
        %v1925 = vadd.f32 %v1418, %v1924
        %v1926 = vpop.f32.mrf.mxu0
        %1927 = vmatprep.mubr.f32.mxu0 0.0
        %1928 = vmatmul.mubr.f32.gmra.mxu0 %v1572
        %v1929 = vpop.f32.mrf.mxu0
        %v1930 = vadd.f32 %v1418, %v1929
        %v1931 = vpop.f32.mrf.mxu0
        %1932 = vmatprep.mubr.f32.mxu0 0.0
        %1933 = vmatmul.mubr.f32.gmra.mxu0 %v1575
        %v1934 = vpop.f32.mrf.mxu0
        %v1935 = vadd.f32 %v1418, %v1934
        %v1936 = vpop.f32.mrf.mxu0
        %1937 = vmatprep.mubr.f32.mxu0 0.0
        %1938 = vmatmul.mubr.f32.gmra.mxu0 %v1578
        %v1939 = vpop.f32.mrf.mxu0
        %v1940 = vadd.f32 %v1418, %v1939
        %v1941 = vpop.f32.mrf.mxu0
        %1942 = vmatprep.mubr.f32.mxu0 0.0
        %1943 = vmatmul.mubr.f32.gmra.mxu0 %v1581
        %v1944 = vpop.f32.mrf.mxu0
        %v1945 = vadd.f32 %v1418, %v1944
        %v1946 = vpop.f32.mrf.mxu0
        %1947 = vmatprep.mubr.f32.mxu0 0.0
        %1948 = vmatmul.mubr.f32.gmra.mxu0 %v1584
        %v1949 = vpop.f32.mrf.mxu0
        %v1950 = vadd.f32 %v1418, %v1949
        %v1951 = vpop.f32.mrf.mxu0
        %1952 = vmatprep.mubr.f32.mxu0 0.0
        %1953 = vmatmul.mubr.f32.gmra.mxu0 %v1587
        %v1954 = vpop.f32.mrf.mxu0
        %v1955 = vadd.f32 %v1418, %v1954
        %v1956 = vpop.f32.mrf.mxu0
        %1957 = vmatprep.mubr.f32.mxu0 0.0
        %1958 = vmatmul.mubr.f32.gmra.mxu0 %v1590
        %v1959 = vpop.f32.mrf.mxu0
        %v1960 = vadd.f32 %v1418, %v1959
        %v1961 = vpop.f32.mrf.mxu0
        %1962 = vmatprep.mubr.f32.mxu0 0.0
        %1963 = vmatmul.mubr.f32.gmra.mxu0 %v1593
        %v1964 = vpop.f32.mrf.mxu0
        %v1965 = vadd.f32 %v1418, %v1964
        %v1966 = vpop.f32.mrf.mxu0
        %1967 = vmatprep.mubr.f32.mxu0 0.0
        %1968 = vmatmul.mubr.f32.gmra.mxu0 %v1596
        %v1969 = vpop.f32.mrf.mxu0
        %v1970 = vadd.f32 %v1418, %v1969
        %v1971 = vpop.f32.mrf.mxu0
        %1972 = vmatprep.mubr.f32.mxu0 0.0
        %1973 = vmatmul.mubr.f32.gmra.mxu0 %v1599
        %v1974 = vpop.f32.mrf.mxu0
        %v1975 = vadd.f32 %v1418, %v1974
        %v1976 = vpop.f32.mrf.mxu0
        %1977 = vmatprep.mubr.f32.mxu0 0.0
        %1978 = vmatmul.mubr.f32.gmra.mxu0 %v1602
        %v1979 = vpop.f32.mrf.mxu0
        %v1980 = vadd.f32 %v1418, %v1979
        %v1981 = vpop.f32.mrf.mxu0
        %1982 = vmatprep.mubr.f32.mxu0 0.0
        %1983 = vmatmul.mubr.f32.gmra.mxu0 %v1605
        %v1984 = vpop.f32.mrf.mxu0
        %v1985 = vadd.f32 %v1418, %v1984
        %v1986 = vpop.f32.mrf.mxu0
        %1987 = vmatprep.mubr.f32.mxu0 0.0
        %1988 = vmatmul.mubr.f32.gmra.mxu0 %v1608
        %v1989 = vpop.f32.mrf.mxu0
        %v1990 = vadd.f32 %v1418, %v1989
        %v1991 = vpop.f32.mrf.mxu0
        %1992 = vmatprep.mubr.f32.mxu0 0.0
        %1993 = vmatmul.mubr.f32.gmra.mxu0 %v1611
        %v1994 = vpop.f32.mrf.mxu0
        %v1995 = vadd.f32 %v1418, %v1994
        %v1996 = vpop.f32.mrf.mxu0
        %1997 = vdwg.mxu0
        %v1998 = vxor.u32 %v1680, 2147483648
        %v1999 = vxor.u32 %v1685, 2147483648
        %v2000 = vxor.u32 %v1690, 2147483648
        %v2001 = vxor.u32 %v1695, 2147483648
        %v2002 = vxor.u32 %v1700, 2147483648
        %v2003 = vxor.u32 %v1705, 2147483648
        %v2004 = vxor.u32 %v1710, 2147483648
        %v2005 = vxor.u32 %v1715, 2147483648
        %v2006 = vxor.u32 %v1720, 2147483648
        %v2007 = vxor.u32 %v1725, 2147483648
        %v2008 = vxor.u32 %v1730, 2147483648
        %v2009 = vxor.u32 %v1735, 2147483648
        %v2010 = vxor.u32 %v1740, 2147483648
        %v2011 = vxor.u32 %v1745, 2147483648
        %v2012 = vxor.u32 %v1750, 2147483648
        %v2013 = vxor.u32 %v1755, 2147483648
        %v2014 = vxor.u32 %v1760, 2147483648
        %v2015 = vxor.u32 %v1765, 2147483648
        %v2016 = vxor.u32 %v1770, 2147483648
        %v2017 = vxor.u32 %v1775, 2147483648
        %v2018 = vxor.u32 %v1780, 2147483648
        %v2019 = vxor.u32 %v1785, 2147483648
        %v2020 = vxor.u32 %v1790, 2147483648
        %v2021 = vxor.u32 %v1795, 2147483648
        %v2022 = vxor.u32 %v1800, 2147483648
        %v2023 = vxor.u32 %v1805, 2147483648
        %v2024 = vxor.u32 %v1810, 2147483648
        %v2025 = vxor.u32 %v1815, 2147483648
        %v2026 = vxor.u32 %v1820, 2147483648
        %v2027 = vxor.u32 %v1825, 2147483648
        %v2028 = vxor.u32 %v1830, 2147483648
        %v2029 = vxor.u32 %v1835, 2147483648
        %v2030 = vxor.u32 %v1840, 2147483648
        %v2031 = vxor.u32 %v1845, 2147483648
        %v2032 = vxor.u32 %v1850, 2147483648
        %v2033 = vxor.u32 %v1855, 2147483648
        %v2034 = vxor.u32 %v1860, 2147483648
        %v2035 = vxor.u32 %v1865, 2147483648
        %v2036 = vxor.u32 %v1870, 2147483648
        %v2037 = vxor.u32 %v1875, 2147483648
        %v2038 = vxor.u32 %v1880, 2147483648
        %v2039 = vxor.u32 %v1885, 2147483648
        %v2040 = vxor.u32 %v1890, 2147483648
        %v2041 = vxor.u32 %v1895, 2147483648
        %v2042 = vxor.u32 %v1900, 2147483648
        %v2043 = vxor.u32 %v1905, 2147483648
        %v2044 = vxor.u32 %v1910, 2147483648
        %v2045 = vxor.u32 %v1915, 2147483648
        %v2046 = vxor.u32 %v1920, 2147483648
        %v2047 = vxor.u32 %v1925, 2147483648
        %v2048 = vxor.u32 %v1930, 2147483648
        %v2049 = vxor.u32 %v1935, 2147483648
        %v2050 = vxor.u32 %v1940, 2147483648
        %v2051 = vxor.u32 %v1945, 2147483648
        %v2052 = vxor.u32 %v1950, 2147483648
        %v2053 = vxor.u32 %v1955, 2147483648
        %v2054 = vxor.u32 %v1960, 2147483648
        %v2055 = vxor.u32 %v1965, 2147483648
        %v2056 = vxor.u32 %v1970, 2147483648
        %v2057 = vxor.u32 %v1975, 2147483648
        %v2058 = vxor.u32 %v1980, 2147483648
        %v2059 = vxor.u32 %v1985, 2147483648
        %v2060 = vxor.u32 %v1990, 2147483648
        %v2061 = vxor.u32 %v1995, 2147483648
        %v2062 = vmul.f32 %v1998, 1.442695
        %v2063 = vpow.pop %v2062
        %v2064 = vmul.f32 %v1999, 1.442695
        %v2065 = vpow.pop %v2064
        %v2066 = vmul.f32 %v2000, 1.442695
        %v2067 = vpow.pop %v2066
        %v2068 = vmul.f32 %v2001, 1.442695
        %v2069 = vpow.pop %v2068
        %v2070 = vmul.f32 %v2002, 1.442695
        %v2071 = vpow.pop %v2070
        %v2072 = vmul.f32 %v2003, 1.442695
        %v2073 = vpow.pop %v2072
        %v2074 = vmul.f32 %v2004, 1.442695
        %v2075 = vpow.pop %v2074
        %v2076 = vmul.f32 %v2005, 1.442695
        %v2077 = vpow.pop %v2076
        %v2078 = vmul.f32 %v2006, 1.442695
        %v2079 = vpow.pop %v2078
        %v2080 = vmul.f32 %v2007, 1.442695
        %v2081 = vpow.pop %v2080
        %v2082 = vmul.f32 %v2008, 1.442695
        %v2083 = vpow.pop %v2082
        %v2084 = vmul.f32 %v2009, 1.442695
        %v2085 = vpow.pop %v2084
        %v2086 = vmul.f32 %v2010, 1.442695
        %v2087 = vpow.pop %v2086
        %v2088 = vmul.f32 %v2011, 1.442695
        %v2089 = vpow.pop %v2088
        %v2090 = vmul.f32 %v2012, 1.442695
        %v2091 = vpow.pop %v2090
        %v2092 = vmul.f32 %v2013, 1.442695
        %v2093 = vpow.pop %v2092
        %v2094 = vmul.f32 %v2014, 1.442695
        %v2095 = vpow.pop %v2094
        %v2096 = vmul.f32 %v2015, 1.442695
        %v2097 = vpow.pop %v2096
        %v2098 = vmul.f32 %v2016, 1.442695
        %v2099 = vpow.pop %v2098
        %v2100 = vmul.f32 %v2017, 1.442695
        %v2101 = vpow.pop %v2100
        %v2102 = vmul.f32 %v2018, 1.442695
        %v2103 = vpow.pop %v2102
        %v2104 = vmul.f32 %v2019, 1.442695
        %v2105 = vpow.pop %v2104
        %v2106 = vmul.f32 %v2020, 1.442695
        %v2107 = vpow.pop %v2106
        %v2108 = vmul.f32 %v2021, 1.442695
        %v2109 = vpow.pop %v2108
        %v2110 = vmul.f32 %v2022, 1.442695
        %v2111 = vpow.pop %v2110
        %v2112 = vmul.f32 %v2023, 1.442695
        %v2113 = vpow.pop %v2112
        %v2114 = vmul.f32 %v2024, 1.442695
        %v2115 = vpow.pop %v2114
        %v2116 = vmul.f32 %v2025, 1.442695
        %v2117 = vpow.pop %v2116
        %v2118 = vmul.f32 %v2026, 1.442695
        %v2119 = vpow.pop %v2118
        %v2120 = vmul.f32 %v2027, 1.442695
        %v2121 = vpow.pop %v2120
        %v2122 = vmul.f32 %v2028, 1.442695
        %v2123 = vpow.pop %v2122
        %v2124 = vmul.f32 %v2029, 1.442695
        %v2125 = vpow.pop %v2124
        %v2126 = vmul.f32 %v2030, 1.442695
        %v2127 = vpow.pop %v2126
        %v2128 = vmul.f32 %v2031, 1.442695
        %v2129 = vpow.pop %v2128
        %v2130 = vmul.f32 %v2032, 1.442695
        %v2131 = vpow.pop %v2130
        %v2132 = vmul.f32 %v2033, 1.442695
        %v2133 = vpow.pop %v2132
        %v2134 = vmul.f32 %v2034, 1.442695
        %v2135 = vpow.pop %v2134
        %v2136 = vmul.f32 %v2035, 1.442695
        %v2137 = vpow.pop %v2136
        %v2138 = vmul.f32 %v2036, 1.442695
        %v2139 = vpow.pop %v2138
        %v2140 = vmul.f32 %v2037, 1.442695
        %v2141 = vpow.pop %v2140
        %v2142 = vmul.f32 %v2038, 1.442695
        %v2143 = vpow.pop %v2142
        %v2144 = vmul.f32 %v2039, 1.442695
        %v2145 = vpow.pop %v2144
        %v2146 = vmul.f32 %v2040, 1.442695
        %v2147 = vpow.pop %v2146
        %v2148 = vmul.f32 %v2041, 1.442695
        %v2149 = vpow.pop %v2148
        %v2150 = vmul.f32 %v2042, 1.442695
        %v2151 = vpow.pop %v2150
        %v2152 = vmul.f32 %v2043, 1.442695
        %v2153 = vpow.pop %v2152
        %v2154 = vmul.f32 %v2044, 1.442695
        %v2155 = vpow.pop %v2154
        %v2156 = vmul.f32 %v2045, 1.442695
        %v2157 = vpow.pop %v2156
        %v2158 = vmul.f32 %v2046, 1.442695
        %v2159 = vpow.pop %v2158
        %v2160 = vmul.f32 %v2047, 1.442695
        %v2161 = vpow.pop %v2160
        %v2162 = vmul.f32 %v2048, 1.442695
        %v2163 = vpow.pop %v2162
        %v2164 = vmul.f32 %v2049, 1.442695
        %v2165 = vpow.pop %v2164
        %v2166 = vmul.f32 %v2050, 1.442695
        %v2167 = vpow.pop %v2166
        %v2168 = vmul.f32 %v2051, 1.442695
        %v2169 = vpow.pop %v2168
        %v2170 = vmul.f32 %v2052, 1.442695
        %v2171 = vpow.pop %v2170
        %v2172 = vmul.f32 %v2053, 1.442695
        %v2173 = vpow.pop %v2172
        %v2174 = vmul.f32 %v2054, 1.442695
        %v2175 = vpow.pop %v2174
        %v2176 = vmul.f32 %v2055, 1.442695
        %v2177 = vpow.pop %v2176
        %v2178 = vmul.f32 %v2056, 1.442695
        %v2179 = vpow.pop %v2178
        %v2180 = vmul.f32 %v2057, 1.442695
        %v2181 = vpow.pop %v2180
        %v2182 = vmul.f32 %v2058, 1.442695
        %v2183 = vpow.pop %v2182
        %v2184 = vmul.f32 %v2059, 1.442695
        %v2185 = vpow.pop %v2184
        %v2186 = vmul.f32 %v2060, 1.442695
        %v2187 = vpow.pop %v2186
        %v2188 = vmul.f32 %v2061, 1.442695
        %v2189 = vpow.pop %v2188
        %v2190 = vadd.f32 %v2063, 1.0
        %v2191 = vadd.f32 %v2065, 1.0
        %v2192 = vadd.f32 %v2067, 1.0
        %v2193 = vadd.f32 %v2069, 1.0
        %v2194 = vadd.f32 %v2071, 1.0
        %v2195 = vadd.f32 %v2073, 1.0
        %v2196 = vadd.f32 %v2075, 1.0
        %v2197 = vadd.f32 %v2077, 1.0
        %v2198 = vadd.f32 %v2079, 1.0
        %v2199 = vadd.f32 %v2081, 1.0
        %v2200 = vadd.f32 %v2083, 1.0
        %v2201 = vadd.f32 %v2085, 1.0
        %v2202 = vadd.f32 %v2087, 1.0
        %v2203 = vadd.f32 %v2089, 1.0
        %v2204 = vadd.f32 %v2091, 1.0
        %v2205 = vadd.f32 %v2093, 1.0
        %v2206 = vadd.f32 %v2095, 1.0
        %v2207 = vadd.f32 %v2097, 1.0
        %v2208 = vadd.f32 %v2099, 1.0
        %v2209 = vadd.f32 %v2101, 1.0
        %v2210 = vadd.f32 %v2103, 1.0
        %v2211 = vadd.f32 %v2105, 1.0
        %v2212 = vadd.f32 %v2107, 1.0
        %v2213 = vadd.f32 %v2109, 1.0
        %v2214 = vadd.f32 %v2111, 1.0
        %v2215 = vadd.f32 %v2113, 1.0
        %v2216 = vadd.f32 %v2115, 1.0
        %v2217 = vadd.f32 %v2117, 1.0
        %v2218 = vadd.f32 %v2119, 1.0
        %v2219 = vadd.f32 %v2121, 1.0
        %v2220 = vadd.f32 %v2123, 1.0
        %v2221 = vadd.f32 %v2125, 1.0
        %v2222 = vadd.f32 %v2127, 1.0
        %v2223 = vadd.f32 %v2129, 1.0
        %v2224 = vadd.f32 %v2131, 1.0
        %v2225 = vadd.f32 %v2133, 1.0
        %v2226 = vadd.f32 %v2135, 1.0
        %v2227 = vadd.f32 %v2137, 1.0
        %v2228 = vadd.f32 %v2139, 1.0
        %v2229 = vadd.f32 %v2141, 1.0
        %v2230 = vadd.f32 %v2143, 1.0
        %v2231 = vadd.f32 %v2145, 1.0
        %v2232 = vadd.f32 %v2147, 1.0
        %v2233 = vadd.f32 %v2149, 1.0
        %v2234 = vadd.f32 %v2151, 1.0
        %v2235 = vadd.f32 %v2153, 1.0
        %v2236 = vadd.f32 %v2155, 1.0
        %v2237 = vadd.f32 %v2157, 1.0
        %v2238 = vadd.f32 %v2159, 1.0
        %v2239 = vadd.f32 %v2161, 1.0
        %v2240 = vadd.f32 %v2163, 1.0
        %v2241 = vadd.f32 %v2165, 1.0
        %v2242 = vadd.f32 %v2167, 1.0
        %v2243 = vadd.f32 %v2169, 1.0
        %v2244 = vadd.f32 %v2171, 1.0
        %v2245 = vadd.f32 %v2173, 1.0
        %v2246 = vadd.f32 %v2175, 1.0
        %v2247 = vadd.f32 %v2177, 1.0
        %v2248 = vadd.f32 %v2179, 1.0
        %v2249 = vadd.f32 %v2181, 1.0
        %v2250 = vadd.f32 %v2183, 1.0
        %v2251 = vadd.f32 %v2185, 1.0
        %v2252 = vadd.f32 %v2187, 1.0
        %v2253 = vadd.f32 %v2189, 1.0
        %v2254 = vrcp.pop %v2190
        %v2255 = vmul.f32 1.0, %v2254
        %v2256 = vrcp.pop %v2191
        %v2257 = vmul.f32 1.0, %v2256
        %v2258 = vrcp.pop %v2192
        %v2259 = vmul.f32 1.0, %v2258
        %v2260 = vrcp.pop %v2193
        %v2261 = vmul.f32 1.0, %v2260
        %v2262 = vrcp.pop %v2194
        %v2263 = vmul.f32 1.0, %v2262
        %v2264 = vrcp.pop %v2195
        %v2265 = vmul.f32 1.0, %v2264
        %v2266 = vrcp.pop %v2196
        %v2267 = vmul.f32 1.0, %v2266
        %v2268 = vrcp.pop %v2197
        %v2269 = vmul.f32 1.0, %v2268
        %v2270 = vrcp.pop %v2198
        %v2271 = vmul.f32 1.0, %v2270
        %v2272 = vrcp.pop %v2199
        %v2273 = vmul.f32 1.0, %v2272
        %v2274 = vrcp.pop %v2200
        %v2275 = vmul.f32 1.0, %v2274
        %v2276 = vrcp.pop %v2201
        %v2277 = vmul.f32 1.0, %v2276
        %v2278 = vrcp.pop %v2202
        %v2279 = vmul.f32 1.0, %v2278
        %v2280 = vrcp.pop %v2203
        %v2281 = vmul.f32 1.0, %v2280
        %v2282 = vrcp.pop %v2204
        %v2283 = vmul.f32 1.0, %v2282
        %v2284 = vrcp.pop %v2205
        %v2285 = vmul.f32 1.0, %v2284
        %v2286 = vrcp.pop %v2206
        %v2287 = vmul.f32 1.0, %v2286
        %v2288 = vrcp.pop %v2207
        %v2289 = vmul.f32 1.0, %v2288
        %v2290 = vrcp.pop %v2208
        %v2291 = vmul.f32 1.0, %v2290
        %v2292 = vrcp.pop %v2209
        %v2293 = vmul.f32 1.0, %v2292
        %v2294 = vrcp.pop %v2210
        %v2295 = vmul.f32 1.0, %v2294
        %v2296 = vrcp.pop %v2211
        %v2297 = vmul.f32 1.0, %v2296
        %v2298 = vrcp.pop %v2212
        %v2299 = vmul.f32 1.0, %v2298
        %v2300 = vrcp.pop %v2213
        %v2301 = vmul.f32 1.0, %v2300
        %v2302 = vrcp.pop %v2214
        %v2303 = vmul.f32 1.0, %v2302
        %v2304 = vrcp.pop %v2215
        %v2305 = vmul.f32 1.0, %v2304
        %v2306 = vrcp.pop %v2216
        %v2307 = vmul.f32 1.0, %v2306
        %v2308 = vrcp.pop %v2217
        %v2309 = vmul.f32 1.0, %v2308
        %v2310 = vrcp.pop %v2218
        %v2311 = vmul.f32 1.0, %v2310
        %v2312 = vrcp.pop %v2219
        %v2313 = vmul.f32 1.0, %v2312
        %v2314 = vrcp.pop %v2220
        %v2315 = vmul.f32 1.0, %v2314
        %v2316 = vrcp.pop %v2221
        %v2317 = vmul.f32 1.0, %v2316
        %v2318 = vrcp.pop %v2222
        %v2319 = vmul.f32 1.0, %v2318
        %v2320 = vrcp.pop %v2223
        %v2321 = vmul.f32 1.0, %v2320
        %v2322 = vrcp.pop %v2224
        %v2323 = vmul.f32 1.0, %v2322
        %v2324 = vrcp.pop %v2225
        %v2325 = vmul.f32 1.0, %v2324
        %v2326 = vrcp.pop %v2226
        %v2327 = vmul.f32 1.0, %v2326
        %v2328 = vrcp.pop %v2227
        %v2329 = vmul.f32 1.0, %v2328
        %v2330 = vrcp.pop %v2228
        %v2331 = vmul.f32 1.0, %v2330
        %v2332 = vrcp.pop %v2229
        %v2333 = vmul.f32 1.0, %v2332
        %v2334 = vrcp.pop %v2230
        %v2335 = vmul.f32 1.0, %v2334
        %v2336 = vrcp.pop %v2231
        %v2337 = vmul.f32 1.0, %v2336
        %v2338 = vrcp.pop %v2232
        %v2339 = vmul.f32 1.0, %v2338
        %v2340 = vrcp.pop %v2233
        %v2341 = vmul.f32 1.0, %v2340
        %v2342 = vrcp.pop %v2234
        %v2343 = vmul.f32 1.0, %v2342
        %v2344 = vrcp.pop %v2235
        %v2345 = vmul.f32 1.0, %v2344
        %v2346 = vrcp.pop %v2236
        %v2347 = vmul.f32 1.0, %v2346
        %v2348 = vrcp.pop %v2237
        %v2349 = vmul.f32 1.0, %v2348
        %v2350 = vrcp.pop %v2238
        %v2351 = vmul.f32 1.0, %v2350
        %v2352 = vrcp.pop %v2239
        %v2353 = vmul.f32 1.0, %v2352
        %v2354 = vrcp.pop %v2240
        %v2355 = vmul.f32 1.0, %v2354
        %v2356 = vrcp.pop %v2241
        %v2357 = vmul.f32 1.0, %v2356
        %v2358 = vrcp.pop %v2242
        %v2359 = vmul.f32 1.0, %v2358
        %v2360 = vrcp.pop %v2243
        %v2361 = vmul.f32 1.0, %v2360
        %v2362 = vrcp.pop %v2244
        %v2363 = vmul.f32 1.0, %v2362
        %v2364 = vrcp.pop %v2245
        %v2365 = vmul.f32 1.0, %v2364
        %v2366 = vrcp.pop %v2246
        %v2367 = vmul.f32 1.0, %v2366
        %v2368 = vrcp.pop %v2247
        %v2369 = vmul.f32 1.0, %v2368
        %v2370 = vrcp.pop %v2248
        %v2371 = vmul.f32 1.0, %v2370
        %v2372 = vrcp.pop %v2249
        %v2373 = vmul.f32 1.0, %v2372
        %v2374 = vrcp.pop %v2250
        %v2375 = vmul.f32 1.0, %v2374
        %v2376 = vrcp.pop %v2251
        %v2377 = vmul.f32 1.0, %v2376
        %v2378 = vrcp.pop %v2252
        %v2379 = vmul.f32 1.0, %v2378
        %v2380 = vrcp.pop %v2253
        %v2381 = vmul.f32 1.0, %v2380
        %s2382 = scalar_lea.vmem %s7, %s1406
        %v2383 = vld [vmem:[%s2382] sm:$0xff]
        %v2384 = vld [vmem:[%s2382 + $0x8] sm:$0xff]
        %v2385 = vld [vmem:[%s2382 + $0x10] sm:$0xff]
        %v2386 = vld [vmem:[%s2382 + $0x18] sm:$0xff]
        %s2387 = scalar_lea.vmem %s8, %s294
        %v2388 = vld [vmem:[%s2387] sm:$0x1]
        %v2390 = vlaneseq
        %v2391 = vshrl.u32 %v2390, 7
        %v2392 = vsub.s32 0, %v2391
        %v2393 = vrot.slane %v2388, %v2392
        %v2396 = vsel %vm1420, %v2255, 0
        %v2399 = vsel %vm1420, %v2257, 0
        %v2402 = vsel %vm1420, %v2259, 0
        %v2405 = vsel %vm1420, %v2261, 0
        %v2408 = vsel %vm1420, %v2263, 0
        %v2411 = vsel %vm1420, %v2265, 0
        %v2414 = vsel %vm1420, %v2267, 0
        %v2417 = vsel %vm1420, %v2269, 0
        %v2420 = vsel %vm1420, %v2271, 0
        %v2423 = vsel %vm1420, %v2273, 0
        %v2426 = vsel %vm1420, %v2275, 0
        %v2429 = vsel %vm1420, %v2277, 0
        %v2432 = vsel %vm1420, %v2279, 0
        %v2435 = vsel %vm1420, %v2281, 0
        %v2438 = vsel %vm1420, %v2283, 0
        %v2441 = vsel %vm1420, %v2285, 0
        %v2444 = vsel %vm1420, %v2287, 0
        %v2447 = vsel %vm1420, %v2289, 0
        %v2450 = vsel %vm1420, %v2291, 0
        %v2453 = vsel %vm1420, %v2293, 0
        %v2456 = vsel %vm1420, %v2295, 0
        %v2459 = vsel %vm1420, %v2297, 0
        %v2462 = vsel %vm1420, %v2299, 0
        %v2465 = vsel %vm1420, %v2301, 0
        %v2468 = vsel %vm1420, %v2303, 0
        %v2471 = vsel %vm1420, %v2305, 0
        %v2474 = vsel %vm1420, %v2307, 0
        %v2477 = vsel %vm1420, %v2309, 0
        %v2480 = vsel %vm1420, %v2311, 0
        %v2483 = vsel %vm1420, %v2313, 0
        %v2486 = vsel %vm1420, %v2315, 0
        %v2489 = vsel %vm1420, %v2317, 0
        %v2492 = vsel %vm1420, %v2319, 0
        %v2495 = vsel %vm1420, %v2321, 0
        %v2498 = vsel %vm1420, %v2323, 0
        %v2501 = vsel %vm1420, %v2325, 0
        %v2504 = vsel %vm1420, %v2327, 0
        %v2507 = vsel %vm1420, %v2329, 0
        %v2510 = vsel %vm1420, %v2331, 0
        %v2513 = vsel %vm1420, %v2333, 0
        %v2516 = vsel %vm1420, %v2335, 0
        %v2519 = vsel %vm1420, %v2337, 0
        %v2522 = vsel %vm1420, %v2339, 0
        %v2525 = vsel %vm1420, %v2341, 0
        %v2528 = vsel %vm1420, %v2343, 0
        %v2531 = vsel %vm1420, %v2345, 0
        %v2534 = vsel %vm1420, %v2347, 0
        %v2537 = vsel %vm1420, %v2349, 0
        %v2540 = vsel %vm1420, %v2351, 0
        %v2543 = vsel %vm1420, %v2353, 0
        %v2546 = vsel %vm1420, %v2355, 0
        %v2549 = vsel %vm1420, %v2357, 0
        %v2552 = vsel %vm1420, %v2359, 0
        %v2555 = vsel %vm1420, %v2361, 0
        %v2558 = vsel %vm1420, %v2363, 0
        %v2561 = vsel %vm1420, %v2365, 0
        %v2564 = vsel %vm1420, %v2367, 0
        %v2567 = vsel %vm1420, %v2369, 0
        %v2570 = vsel %vm1420, %v2371, 0
        %v2573 = vsel %vm1420, %v2373, 0
        %v2576 = vsel %vm1420, %v2375, 0
        %v2579 = vsel %vm1420, %v2377, 0
        %v2582 = vsel %vm1420, %v2379, 0
        %v2585 = vsel %vm1420, %v2381, 0
        %2587 = vmatprep.subr.mxu0 0.0
        %2588 = vmatpush1.msra.mxu0 0.0
        %2589 = vmatprep.subr.mxu0 0.0
        %2590 = vmatpush1.msra.mxu0 0.0
        %2591 = vmatprep.subr.mxu0 0.0
        %2592 = vmatpush1.msra.mxu0 0.0
        %2593 = vmatprep.subr.mxu0 0.0
        %2594 = vmatpush1.msra.mxu0 0.0
        %2595 = vmatprep.subr.mxu0 0.0
        %2596 = vmatpush1.msra.mxu0 0.0
        %2597 = vmatprep.subr.mxu0 0.0
        %2598 = vmatpush1.msra.mxu0 0.0
        %2599 = vmatprep.subr.mxu0 0.0
        %2600 = vmatpush1.msra.mxu0 0.0
        %2601 = vmatprep.subr.mxu0 0.0
        %2602 = vmatpush1.msra.mxu0 0.0
        %2603 = vmatprep.subr.mxu0 0.0
        %2604 = vmatpush1.msra.mxu0 0.0
        %2605 = vmatprep.subr.mxu0 0.0
        %2606 = vmatpush1.msra.mxu0 0.0
        %2607 = vmatprep.subr.mxu0 0.0
        %2608 = vmatpush1.msra.mxu0 0.0
        %2609 = vmatprep.subr.mxu0 0.0
        %2610 = vmatpush1.msra.mxu0 0.0
        %2611 = vmatprep.subr.mxu0 0.0
        %2612 = vmatpush1.msra.mxu0 %v2386
        %2613 = vmatprep.subr.mxu0 0.0
        %2614 = vmatpush1.msra.mxu0 %v2385
        %2615 = vmatprep.subr.mxu0 0.0
        %2616 = vmatpush1.msra.mxu0 %v2384
        %2617 = vmatprep.subr.mxu0 0.0
        %2618 = vmatpush1.msra.mxu0 %v2383
        %2619 = vmatprep.subr.mxu0 0.0
        %2620 = vmatpush2.msra.mxu0 0.0
        %2621 = vmatprep.subr.mxu0 0.0
        %2622 = vmatpush2.msra.mxu0 0.0
        %2623 = vmatprep.subr.mxu0 0.0
        %2624 = vmatpush2.msra.mxu0 0.0
        %2625 = vmatprep.subr.mxu0 0.0
        %2626 = vmatpush2.msra.mxu0 0.0
        %2627 = vmatprep.subr.mxu0 0.0
        %2628 = vmatpush2.msra.mxu0 0.0
        %2629 = vmatprep.subr.mxu0 0.0
        %2630 = vmatpush2.msra.mxu0 0.0
        %2631 = vmatprep.subr.mxu0 0.0
        %2632 = vmatpush2.msra.mxu0 0.0
        %2633 = vmatprep.subr.mxu0 0.0
        %2634 = vmatpush2.msra.mxu0 0.0
        %2635 = vmatprep.subr.mxu0 0.0
        %2636 = vmatpush2.msra.mxu0 0.0
        %2637 = vmatprep.subr.mxu0 0.0
        %2638 = vmatpush2.msra.mxu0 0.0
        %2639 = vmatprep.subr.mxu0 0.0
        %2640 = vmatpush2.msra.mxu0 0.0
        %2641 = vmatprep.subr.mxu0 0.0
        %2642 = vmatpush2.msra.mxu0 0.0
        %2643 = vmatprep.subr.mxu0 0.0
        %2644 = vmatpush2.msra.mxu0 0.0
        %2645 = vmatprep.subr.mxu0 0.0
        %2646 = vmatpush2.msra.mxu0 0.0
        %2647 = vmatprep.subr.mxu0 0.0
        %2648 = vmatpush2.msra.mxu0 0.0
        %2649 = vmatprep.subr.mxu0 0.0
        %2650 = vmatpush2.msra.mxu0 0.0
        %2651 = vmatprep.mubr.f32.mxu0 0.0
        %2652 = vmatmul.mubr.f32.gmra.mxu0 %v2396
        %v2653 = vpop.f32.mrf.mxu0
        %v2654 = vadd.f32 %v2393, %v2653
        %v2655 = vpop.f32.mrf.mxu0
        %2656 = vmatprep.mubr.f32.mxu0 0.0
        %2657 = vmatmul.mubr.f32.gmra.mxu0 %v2399
        %v2658 = vpop.f32.mrf.mxu0
        %v2659 = vadd.f32 %v2393, %v2658
        %v2660 = vpop.f32.mrf.mxu0
        %2661 = vmatprep.mubr.f32.mxu0 0.0
        %2662 = vmatmul.mubr.f32.gmra.mxu0 %v2402
        %v2663 = vpop.f32.mrf.mxu0
        %v2664 = vadd.f32 %v2393, %v2663
        %v2665 = vpop.f32.mrf.mxu0
        %2666 = vmatprep.mubr.f32.mxu0 0.0
        %2667 = vmatmul.mubr.f32.gmra.mxu0 %v2405
        %v2668 = vpop.f32.mrf.mxu0
        %v2669 = vadd.f32 %v2393, %v2668
        %v2670 = vpop.f32.mrf.mxu0
        %2671 = vmatprep.mubr.f32.mxu0 0.0
        %2672 = vmatmul.mubr.f32.gmra.mxu0 %v2408
        %v2673 = vpop.f32.mrf.mxu0
        %v2674 = vadd.f32 %v2393, %v2673
        %v2675 = vpop.f32.mrf.mxu0
        %2676 = vmatprep.mubr.f32.mxu0 0.0
        %2677 = vmatmul.mubr.f32.gmra.mxu0 %v2411
        %v2678 = vpop.f32.mrf.mxu0
        %v2679 = vadd.f32 %v2393, %v2678
        %v2680 = vpop.f32.mrf.mxu0
        %2681 = vmatprep.mubr.f32.mxu0 0.0
        %2682 = vmatmul.mubr.f32.gmra.mxu0 %v2414
        %v2683 = vpop.f32.mrf.mxu0
        %v2684 = vadd.f32 %v2393, %v2683
        %v2685 = vpop.f32.mrf.mxu0
        %2686 = vmatprep.mubr.f32.mxu0 0.0
        %2687 = vmatmul.mubr.f32.gmra.mxu0 %v2417
        %v2688 = vpop.f32.mrf.mxu0
        %v2689 = vadd.f32 %v2393, %v2688
        %v2690 = vpop.f32.mrf.mxu0
        %2691 = vmatprep.mubr.f32.mxu0 0.0
        %2692 = vmatmul.mubr.f32.gmra.mxu0 %v2420
        %v2693 = vpop.f32.mrf.mxu0
        %v2694 = vadd.f32 %v2393, %v2693
        %v2695 = vpop.f32.mrf.mxu0
        %2696 = vmatprep.mubr.f32.mxu0 0.0
        %2697 = vmatmul.mubr.f32.gmra.mxu0 %v2423
        %v2698 = vpop.f32.mrf.mxu0
        %v2699 = vadd.f32 %v2393, %v2698
        %v2700 = vpop.f32.mrf.mxu0
        %2701 = vmatprep.mubr.f32.mxu0 0.0
        %2702 = vmatmul.mubr.f32.gmra.mxu0 %v2426
        %v2703 = vpop.f32.mrf.mxu0
        %v2704 = vadd.f32 %v2393, %v2703
        %v2705 = vpop.f32.mrf.mxu0
        %2706 = vmatprep.mubr.f32.mxu0 0.0
        %2707 = vmatmul.mubr.f32.gmra.mxu0 %v2429
        %v2708 = vpop.f32.mrf.mxu0
        %v2709 = vadd.f32 %v2393, %v2708
        %v2710 = vpop.f32.mrf.mxu0
        %2711 = vmatprep.mubr.f32.mxu0 0.0
        %2712 = vmatmul.mubr.f32.gmra.mxu0 %v2432
        %v2713 = vpop.f32.mrf.mxu0
        %v2714 = vadd.f32 %v2393, %v2713
        %v2715 = vpop.f32.mrf.mxu0
        %2716 = vmatprep.mubr.f32.mxu0 0.0
        %2717 = vmatmul.mubr.f32.gmra.mxu0 %v2435
        %v2718 = vpop.f32.mrf.mxu0
        %v2719 = vadd.f32 %v2393, %v2718
        %v2720 = vpop.f32.mrf.mxu0
        %2721 = vmatprep.mubr.f32.mxu0 0.0
        %2722 = vmatmul.mubr.f32.gmra.mxu0 %v2438
        %v2723 = vpop.f32.mrf.mxu0
        %v2724 = vadd.f32 %v2393, %v2723
        %v2725 = vpop.f32.mrf.mxu0
        %2726 = vmatprep.mubr.f32.mxu0 0.0
        %2727 = vmatmul.mubr.f32.gmra.mxu0 %v2441
        %v2728 = vpop.f32.mrf.mxu0
        %v2729 = vadd.f32 %v2393, %v2728
        %v2730 = vpop.f32.mrf.mxu0
        %2731 = vmatprep.mubr.f32.mxu0 0.0
        %2732 = vmatmul.mubr.f32.gmra.mxu0 %v2444
        %v2733 = vpop.f32.mrf.mxu0
        %v2734 = vadd.f32 %v2393, %v2733
        %v2735 = vpop.f32.mrf.mxu0
        %2736 = vmatprep.mubr.f32.mxu0 0.0
        %2737 = vmatmul.mubr.f32.gmra.mxu0 %v2447
        %v2738 = vpop.f32.mrf.mxu0
        %v2739 = vadd.f32 %v2393, %v2738
        %v2740 = vpop.f32.mrf.mxu0
        %2741 = vmatprep.mubr.f32.mxu0 0.0
        %2742 = vmatmul.mubr.f32.gmra.mxu0 %v2450
        %v2743 = vpop.f32.mrf.mxu0
        %v2744 = vadd.f32 %v2393, %v2743
        %v2745 = vpop.f32.mrf.mxu0
        %2746 = vmatprep.mubr.f32.mxu0 0.0
        %2747 = vmatmul.mubr.f32.gmra.mxu0 %v2453
        %v2748 = vpop.f32.mrf.mxu0
        %v2749 = vadd.f32 %v2393, %v2748
        %v2750 = vpop.f32.mrf.mxu0
        %2751 = vmatprep.mubr.f32.mxu0 0.0
        %2752 = vmatmul.mubr.f32.gmra.mxu0 %v2456
        %v2753 = vpop.f32.mrf.mxu0
        %v2754 = vadd.f32 %v2393, %v2753
        %v2755 = vpop.f32.mrf.mxu0
        %2756 = vmatprep.mubr.f32.mxu0 0.0
        %2757 = vmatmul.mubr.f32.gmra.mxu0 %v2459
        %v2758 = vpop.f32.mrf.mxu0
        %v2759 = vadd.f32 %v2393, %v2758
        %v2760 = vpop.f32.mrf.mxu0
        %2761 = vmatprep.mubr.f32.mxu0 0.0
        %2762 = vmatmul.mubr.f32.gmra.mxu0 %v2462
        %v2763 = vpop.f32.mrf.mxu0
        %v2764 = vadd.f32 %v2393, %v2763
        %v2765 = vpop.f32.mrf.mxu0
        %2766 = vmatprep.mubr.f32.mxu0 0.0
        %2767 = vmatmul.mubr.f32.gmra.mxu0 %v2465
        %v2768 = vpop.f32.mrf.mxu0
        %v2769 = vadd.f32 %v2393, %v2768
        %v2770 = vpop.f32.mrf.mxu0
        %2771 = vmatprep.mubr.f32.mxu0 0.0
        %2772 = vmatmul.mubr.f32.gmra.mxu0 %v2468
        %v2773 = vpop.f32.mrf.mxu0
        %v2774 = vadd.f32 %v2393, %v2773
        %v2775 = vpop.f32.mrf.mxu0
        %2776 = vmatprep.mubr.f32.mxu0 0.0
        %2777 = vmatmul.mubr.f32.gmra.mxu0 %v2471
        %v2778 = vpop.f32.mrf.mxu0
        %v2779 = vadd.f32 %v2393, %v2778
        %v2780 = vpop.f32.mrf.mxu0
        %2781 = vmatprep.mubr.f32.mxu0 0.0
        %2782 = vmatmul.mubr.f32.gmra.mxu0 %v2474
        %v2783 = vpop.f32.mrf.mxu0
        %v2784 = vadd.f32 %v2393, %v2783
        %v2785 = vpop.f32.mrf.mxu0
        %2786 = vmatprep.mubr.f32.mxu0 0.0
        %2787 = vmatmul.mubr.f32.gmra.mxu0 %v2477
        %v2788 = vpop.f32.mrf.mxu0
        %v2789 = vadd.f32 %v2393, %v2788
        %v2790 = vpop.f32.mrf.mxu0
        %2791 = vmatprep.mubr.f32.mxu0 0.0
        %2792 = vmatmul.mubr.f32.gmra.mxu0 %v2480
        %v2793 = vpop.f32.mrf.mxu0
        %v2794 = vadd.f32 %v2393, %v2793
        %v2795 = vpop.f32.mrf.mxu0
        %2796 = vmatprep.mubr.f32.mxu0 0.0
        %2797 = vmatmul.mubr.f32.gmra.mxu0 %v2483
        %v2798 = vpop.f32.mrf.mxu0
        %v2799 = vadd.f32 %v2393, %v2798
        %v2800 = vpop.f32.mrf.mxu0
        %2801 = vmatprep.mubr.f32.mxu0 0.0
        %2802 = vmatmul.mubr.f32.gmra.mxu0 %v2486
        %v2803 = vpop.f32.mrf.mxu0
        %v2804 = vadd.f32 %v2393, %v2803
        %v2805 = vpop.f32.mrf.mxu0
        %2806 = vmatprep.mubr.f32.mxu0 0.0
        %2807 = vmatmul.mubr.f32.gmra.mxu0 %v2489
        %v2808 = vpop.f32.mrf.mxu0
        %v2809 = vadd.f32 %v2393, %v2808
        %v2810 = vpop.f32.mrf.mxu0
        %2811 = vmatprep.mubr.f32.mxu0 0.0
        %2812 = vmatmul.mubr.f32.gmra.mxu0 %v2492
        %v2813 = vpop.f32.mrf.mxu0
        %v2814 = vadd.f32 %v2393, %v2813
        %v2815 = vpop.f32.mrf.mxu0
        %2816 = vmatprep.mubr.f32.mxu0 0.0
        %2817 = vmatmul.mubr.f32.gmra.mxu0 %v2495
        %v2818 = vpop.f32.mrf.mxu0
        %v2819 = vadd.f32 %v2393, %v2818
        %v2820 = vpop.f32.mrf.mxu0
        %2821 = vmatprep.mubr.f32.mxu0 0.0
        %2822 = vmatmul.mubr.f32.gmra.mxu0 %v2498
        %v2823 = vpop.f32.mrf.mxu0
        %v2824 = vadd.f32 %v2393, %v2823
        %v2825 = vpop.f32.mrf.mxu0
        %2826 = vmatprep.mubr.f32.mxu0 0.0
        %2827 = vmatmul.mubr.f32.gmra.mxu0 %v2501
        %v2828 = vpop.f32.mrf.mxu0
        %v2829 = vadd.f32 %v2393, %v2828
        %v2830 = vpop.f32.mrf.mxu0
        %2831 = vmatprep.mubr.f32.mxu0 0.0
        %2832 = vmatmul.mubr.f32.gmra.mxu0 %v2504
        %v2833 = vpop.f32.mrf.mxu0
        %v2834 = vadd.f32 %v2393, %v2833
        %v2835 = vpop.f32.mrf.mxu0
        %2836 = vmatprep.mubr.f32.mxu0 0.0
        %2837 = vmatmul.mubr.f32.gmra.mxu0 %v2507
        %v2838 = vpop.f32.mrf.mxu0
        %v2839 = vadd.f32 %v2393, %v2838
        %v2840 = vpop.f32.mrf.mxu0
        %2841 = vmatprep.mubr.f32.mxu0 0.0
        %2842 = vmatmul.mubr.f32.gmra.mxu0 %v2510
        %v2843 = vpop.f32.mrf.mxu0
        %v2844 = vadd.f32 %v2393, %v2843
        %v2845 = vpop.f32.mrf.mxu0
        %2846 = vmatprep.mubr.f32.mxu0 0.0
        %2847 = vmatmul.mubr.f32.gmra.mxu0 %v2513
        %v2848 = vpop.f32.mrf.mxu0
        %v2849 = vadd.f32 %v2393, %v2848
        %v2850 = vpop.f32.mrf.mxu0
        %2851 = vmatprep.mubr.f32.mxu0 0.0
        %2852 = vmatmul.mubr.f32.gmra.mxu0 %v2516
        %v2853 = vpop.f32.mrf.mxu0
        %v2854 = vadd.f32 %v2393, %v2853
        %v2855 = vpop.f32.mrf.mxu0
        %2856 = vmatprep.mubr.f32.mxu0 0.0
        %2857 = vmatmul.mubr.f32.gmra.mxu0 %v2519
        %v2858 = vpop.f32.mrf.mxu0
        %v2859 = vadd.f32 %v2393, %v2858
        %v2860 = vpop.f32.mrf.mxu0
        %2861 = vmatprep.mubr.f32.mxu0 0.0
        %2862 = vmatmul.mubr.f32.gmra.mxu0 %v2522
        %v2863 = vpop.f32.mrf.mxu0
        %v2864 = vadd.f32 %v2393, %v2863
        %v2865 = vpop.f32.mrf.mxu0
        %2866 = vmatprep.mubr.f32.mxu0 0.0
        %2867 = vmatmul.mubr.f32.gmra.mxu0 %v2525
        %v2868 = vpop.f32.mrf.mxu0
        %v2869 = vadd.f32 %v2393, %v2868
        %v2870 = vpop.f32.mrf.mxu0
        %2871 = vmatprep.mubr.f32.mxu0 0.0
        %2872 = vmatmul.mubr.f32.gmra.mxu0 %v2528
        %v2873 = vpop.f32.mrf.mxu0
        %v2874 = vadd.f32 %v2393, %v2873
        %v2875 = vpop.f32.mrf.mxu0
        %2876 = vmatprep.mubr.f32.mxu0 0.0
        %2877 = vmatmul.mubr.f32.gmra.mxu0 %v2531
        %v2878 = vpop.f32.mrf.mxu0
        %v2879 = vadd.f32 %v2393, %v2878
        %v2880 = vpop.f32.mrf.mxu0
        %2881 = vmatprep.mubr.f32.mxu0 0.0
        %2882 = vmatmul.mubr.f32.gmra.mxu0 %v2534
        %v2883 = vpop.f32.mrf.mxu0
        %v2884 = vadd.f32 %v2393, %v2883
        %v2885 = vpop.f32.mrf.mxu0
        %2886 = vmatprep.mubr.f32.mxu0 0.0
        %2887 = vmatmul.mubr.f32.gmra.mxu0 %v2537
        %v2888 = vpop.f32.mrf.mxu0
        %v2889 = vadd.f32 %v2393, %v2888
        %v2890 = vpop.f32.mrf.mxu0
        %2891 = vmatprep.mubr.f32.mxu0 0.0
        %2892 = vmatmul.mubr.f32.gmra.mxu0 %v2540
        %v2893 = vpop.f32.mrf.mxu0
        %v2894 = vadd.f32 %v2393, %v2893
        %v2895 = vpop.f32.mrf.mxu0
        %2896 = vmatprep.mubr.f32.mxu0 0.0
        %2897 = vmatmul.mubr.f32.gmra.mxu0 %v2543
        %v2898 = vpop.f32.mrf.mxu0
        %v2899 = vadd.f32 %v2393, %v2898
        %v2900 = vpop.f32.mrf.mxu0
        %2901 = vmatprep.mubr.f32.mxu0 0.0
        %2902 = vmatmul.mubr.f32.gmra.mxu0 %v2546
        %v2903 = vpop.f32.mrf.mxu0
        %v2904 = vadd.f32 %v2393, %v2903
        %v2905 = vpop.f32.mrf.mxu0
        %2906 = vmatprep.mubr.f32.mxu0 0.0
        %2907 = vmatmul.mubr.f32.gmra.mxu0 %v2549
        %v2908 = vpop.f32.mrf.mxu0
        %v2909 = vadd.f32 %v2393, %v2908
        %v2910 = vpop.f32.mrf.mxu0
        %2911 = vmatprep.mubr.f32.mxu0 0.0
        %2912 = vmatmul.mubr.f32.gmra.mxu0 %v2552
        %v2913 = vpop.f32.mrf.mxu0
        %v2914 = vadd.f32 %v2393, %v2913
        %v2915 = vpop.f32.mrf.mxu0
        %2916 = vmatprep.mubr.f32.mxu0 0.0
        %2917 = vmatmul.mubr.f32.gmra.mxu0 %v2555
        %v2918 = vpop.f32.mrf.mxu0
        %v2919 = vadd.f32 %v2393, %v2918
        %v2920 = vpop.f32.mrf.mxu0
        %2921 = vmatprep.mubr.f32.mxu0 0.0
        %2922 = vmatmul.mubr.f32.gmra.mxu0 %v2558
        %v2923 = vpop.f32.mrf.mxu0
        %v2924 = vadd.f32 %v2393, %v2923
        %v2925 = vpop.f32.mrf.mxu0
        %2926 = vmatprep.mubr.f32.mxu0 0.0
        %2927 = vmatmul.mubr.f32.gmra.mxu0 %v2561
        %v2928 = vpop.f32.mrf.mxu0
        %v2929 = vadd.f32 %v2393, %v2928
        %v2930 = vpop.f32.mrf.mxu0
        %2931 = vmatprep.mubr.f32.mxu0 0.0
        %2932 = vmatmul.mubr.f32.gmra.mxu0 %v2564
        %v2933 = vpop.f32.mrf.mxu0
        %v2934 = vadd.f32 %v2393, %v2933
        %v2935 = vpop.f32.mrf.mxu0
        %2936 = vmatprep.mubr.f32.mxu0 0.0
        %2937 = vmatmul.mubr.f32.gmra.mxu0 %v2567
        %v2938 = vpop.f32.mrf.mxu0
        %v2939 = vadd.f32 %v2393, %v2938
        %v2940 = vpop.f32.mrf.mxu0
        %2941 = vmatprep.mubr.f32.mxu0 0.0
        %2942 = vmatmul.mubr.f32.gmra.mxu0 %v2570
        %v2943 = vpop.f32.mrf.mxu0
        %v2944 = vadd.f32 %v2393, %v2943
        %v2945 = vpop.f32.mrf.mxu0
        %2946 = vmatprep.mubr.f32.mxu0 0.0
        %2947 = vmatmul.mubr.f32.gmra.mxu0 %v2573
        %v2948 = vpop.f32.mrf.mxu0
        %v2949 = vadd.f32 %v2393, %v2948
        %v2950 = vpop.f32.mrf.mxu0
        %2951 = vmatprep.mubr.f32.mxu0 0.0
        %2952 = vmatmul.mubr.f32.gmra.mxu0 %v2576
        %v2953 = vpop.f32.mrf.mxu0
        %v2954 = vadd.f32 %v2393, %v2953
        %v2955 = vpop.f32.mrf.mxu0
        %2956 = vmatprep.mubr.f32.mxu0 0.0
        %2957 = vmatmul.mubr.f32.gmra.mxu0 %v2579
        %v2958 = vpop.f32.mrf.mxu0
        %v2959 = vadd.f32 %v2393, %v2958
        %v2960 = vpop.f32.mrf.mxu0
        %2961 = vmatprep.mubr.f32.mxu0 0.0
        %2962 = vmatmul.mubr.f32.gmra.mxu0 %v2582
        %v2963 = vpop.f32.mrf.mxu0
        %v2964 = vadd.f32 %v2393, %v2963
        %v2965 = vpop.f32.mrf.mxu0
        %2966 = vmatprep.mubr.f32.mxu0 0.0
        %2967 = vmatmul.mubr.f32.gmra.mxu0 %v2585
        %v2968 = vpop.f32.mrf.mxu0
        %v2969 = vadd.f32 %v2393, %v2968
        %v2970 = vpop.f32.mrf.mxu0
        %2971 = vdwg.mxu0
        %2972 = vst [vmem:[%s292] sm:$0xff] %v2654
        %2973 = vst [vmem:[%s292 + $0x8] sm:$0xff] %v2659
        %2974 = vst [vmem:[%s292 + $0x10] sm:$0xff] %v2664
        %2975 = vst [vmem:[%s292 + $0x18] sm:$0xff] %v2669
        %2976 = vst [vmem:[%s292 + $0x20] sm:$0xff] %v2674
        %2977 = vst [vmem:[%s292 + $0x28] sm:$0xff] %v2679
        %2978 = vst [vmem:[%s292 + $0x30] sm:$0xff] %v2684
        %2979 = vst [vmem:[%s292 + $0x38] sm:$0xff] %v2689
        %2980 = vst [vmem:[%s292 + $0x40] sm:$0xff] %v2694
        %2981 = vst [vmem:[%s292 + $0x48] sm:$0xff] %v2699
        %2982 = vst [vmem:[%s292 + $0x50] sm:$0xff] %v2704
        %2983 = vst [vmem:[%s292 + $0x58] sm:$0xff] %v2709
        %2984 = vst [vmem:[%s292 + $0x60] sm:$0xff] %v2714
        %2985 = vst [vmem:[%s292 + $0x68] sm:$0xff] %v2719
        %2986 = vst [vmem:[%s292 + $0x70] sm:$0xff] %v2724
        %2987 = vst [vmem:[%s292 + $0x78] sm:$0xff] %v2729
        %2988 = vst [vmem:[%s292 + $0x80] sm:$0xff] %v2734
        %2989 = vst [vmem:[%s292 + $0x88] sm:$0xff] %v2739
        %2990 = vst [vmem:[%s292 + $0x90] sm:$0xff] %v2744
        %2991 = vst [vmem:[%s292 + $0x98] sm:$0xff] %v2749
        %2992 = vst [vmem:[%s292 + $0xa0] sm:$0xff] %v2754
        %2993 = vst [vmem:[%s292 + $0xa8] sm:$0xff] %v2759
        %2994 = vst [vmem:[%s292 + $0xb0] sm:$0xff] %v2764
        %2995 = vst [vmem:[%s292 + $0xb8] sm:$0xff] %v2769
        %2996 = vst [vmem:[%s292 + $0xc0] sm:$0xff] %v2774
        %2997 = vst [vmem:[%s292 + $0xc8] sm:$0xff] %v2779
        %2998 = vst [vmem:[%s292 + $0xd0] sm:$0xff] %v2784
        %2999 = vst [vmem:[%s292 + $0xd8] sm:$0xff] %v2789
        %3000 = vst [vmem:[%s292 + $0xe0] sm:$0xff] %v2794
        %3001 = vst [vmem:[%s292 + $0xe8] sm:$0xff] %v2799
        %3002 = vst [vmem:[%s292 + $0xf0] sm:$0xff] %v2804
        %3003 = vst [vmem:[%s292 + $0xf8] sm:$0xff] %v2809
        %3004 = vst [vmem:[%s292 + $0x100] sm:$0xff] %v2814
        %3005 = vst [vmem:[%s292 + $0x108] sm:$0xff] %v2819
        %3006 = vst [vmem:[%s292 + $0x110] sm:$0xff] %v2824
        %3007 = vst [vmem:[%s292 + $0x118] sm:$0xff] %v2829
        %3008 = vst [vmem:[%s292 + $0x120] sm:$0xff] %v2834
        %3009 = vst [vmem:[%s292 + $0x128] sm:$0xff] %v2839
        %3010 = vst [vmem:[%s292 + $0x130] sm:$0xff] %v2844
        %3011 = vst [vmem:[%s292 + $0x138] sm:$0xff] %v2849
        %3012 = vst [vmem:[%s292 + $0x140] sm:$0xff] %v2854
        %3013 = vst [vmem:[%s292 + $0x148] sm:$0xff] %v2859
        %3014 = vst [vmem:[%s292 + $0x150] sm:$0xff] %v2864
        %3015 = vst [vmem:[%s292 + $0x158] sm:$0xff] %v2869
        %3016 = vst [vmem:[%s292 + $0x160] sm:$0xff] %v2874
        %3017 = vst [vmem:[%s292 + $0x168] sm:$0xff] %v2879
        %3018 = vst [vmem:[%s292 + $0x170] sm:$0xff] %v2884
        %3019 = vst [vmem:[%s292 + $0x178] sm:$0xff] %v2889
        %3020 = vst [vmem:[%s292 + $0x180] sm:$0xff] %v2894
        %3021 = vst [vmem:[%s292 + $0x188] sm:$0xff] %v2899
        %3022 = vst [vmem:[%s292 + $0x190] sm:$0xff] %v2904
        %3023 = vst [vmem:[%s292 + $0x198] sm:$0xff] %v2909
        %3024 = vst [vmem:[%s292 + $0x1a0] sm:$0xff] %v2914
        %3025 = vst [vmem:[%s292 + $0x1a8] sm:$0xff] %v2919
        %3026 = vst [vmem:[%s292 + $0x1b0] sm:$0xff] %v2924
        %3027 = vst [vmem:[%s292 + $0x1b8] sm:$0xff] %v2929
        %3028 = vst [vmem:[%s292 + $0x1c0] sm:$0xff] %v2934
        %3029 = vst [vmem:[%s292 + $0x1c8] sm:$0xff] %v2939
        %3030 = vst [vmem:[%s292 + $0x1d0] sm:$0xff] %v2944
        %3031 = vst [vmem:[%s292 + $0x1d8] sm:$0xff] %v2949
        %3032 = vst [vmem:[%s292 + $0x1e0] sm:$0xff] %v2954
        %3033 = vst [vmem:[%s292 + $0x1e8] sm:$0xff] %v2959
        %3034 = vst [vmem:[%s292 + $0x1f0] sm:$0xff] %v2964
        %3035 = vst [vmem:[%s292 + $0x1f8] sm:$0xff] %v2969
      $region56: #{pcn_forward.1} parent=47 // pred_fallthru
        _
      %s3036 = smul.u32 64, %s30
      %p3037 = scmp.lt.s32.totalorder %s3036, 319
      %s3038 = scalar_select %p3037, %s3036, 319
      %s3039 = smul.addr %s3038, 8
      %s3040 = scalar_lea.vmem %s9, %s3039
      // Predicated region
      $region57: #{pcn_forward.1} parent=47 // pred_check
        %p3041 = pneg %p200
      $region58: #{pcn_forward.1} parent=47 // pred_check_branch
        %3043 = sbr.rel (%p3041) target = $region60
      $region59: #{pcn_forward.1} parent=47 // pred_region
        %s3044 = smul.u32 64, %s30
      $region60: #{pcn_forward.1} parent=47 // pred_fallthru
        _
    $region48: #{pcn_forward.1} parent=5 // pred_fallthru
      _
    %p3045 = scmp.le.s32.totalorder 2, %s25
    // Predicated region
    $region61: #{pcn_forward.1} parent=5 // pred_check
      %p3046 = pneg %p3045
    $region62: #{pcn_forward.1} parent=5 // pred_check_branch
      %3048 = sbr.rel (%p3046) target = $region64
    $region63: #{pcn_forward.1} parent=5 // pred_region
      %s3049 = ssub.s32 %s25, 2
      // Predicated region
      $region65: #{pcn_forward.1} parent=63 // pred_check
        %p3050 = pneg %p206
      $region66: #{pcn_forward.1} parent=63 // pred_check_branch
        %3052 = sbr.rel (%p3050) target = $region68
      $region67: #{pcn_forward.1} parent=63 // pred_region
        %s3053 = smul.u32 64, %s31
        %p3054 = scmp.lt.s32.totalorder %s3053, 319
        %s3055 = scalar_select %p3054, %s3053, 319
        %s3056 = smul.addr %s3055, 8
        %s3057 = scalar_lea.vmem %s9, %s3056
      $region68: #{pcn_forward.1} parent=63 // pred_fallthru
        _
    $region64: #{pcn_forward.1} parent=5 // pred_fallthru
      _
  $region6: #{pcn_forward.1} parent=0 // loop_footer
    %s29 = sadd.s32 1, %s25
  $region7: #{pcn_forward.1} parent=0 // loop_footer_branch
    %24 = sbr.rel target = $region3
  $region8: #{pcn_forward.1} parent=0 // loop_exit
    _

</llo_original>
